<compile_context>
chip_gen: v7x
topology: tpu7x:2x2x1
jax: 0.10.0
libtpu: 0.0.40
codegen_flags: <defaults>
</compile_context>

<pallas_src>
import jax
import jax.numpy as jnp
from jax.experimental import pallas as pl
from jax.experimental.pallas import tpu as pltpu

# ---- small synthetic "BERT" config (real BERT: H=768, L=12, NH=12, I=3072) ----
B, S = 2, 8          # batch, seq-len
H, NH = 32, 4        # hidden, heads
HD = H // NH         # head dim (8)
I = 64               # intermediate (FFN) dim
L = 2                # number of transformer layers
V = 100              # vocab size
EPS = 1e-12          # BERT LayerNorm eps

# ---- lane-dense padded layout used inside the kernel ----
HP = 128                              # hidden padded to one full 128-lane vreg row
IP = 128                              # FFN intermediate padded to 128 lanes
QKVP = ((3 * H + 127) // 128) * 128   # fused Q|K|V width padded to a lane multiple (96 -> 128)


# ----------------------------- math helpers -----------------------------
def _ln_padded(x, g, b, eps=EPS):
    """LayerNorm over the real H lanes of a zero-padded [*, HP] tensor.

    Padded lanes are zero, so full-width sums equal real-lane sums; E[x^2]-mu^2
    avoids the (x-mu) contribution of padded lanes; gamma/beta are zero-padded so
    padded lanes stay exactly zero after LN.  Variance clamped at 0 (f32 cancellation).
    """
    inv_h = 1.0 / H
    mu = jnp.sum(x, axis=-1, keepdims=True) * inv_h
    var = jnp.sum(x * x, axis=-1, keepdims=True) * inv_h - mu * mu
    var = jnp.maximum(var, 0.0)
    return (x - mu) * jax.lax.rsqrt(var + eps) * g + b


def _layernorm_ref(x, g, b, eps=EPS):
    mu = jnp.mean(x, axis=-1, keepdims=True)
    xc = x - mu
    var = jnp.mean(xc * xc, axis=-1, keepdims=True)
    return xc * jax.lax.rsqrt(var + eps) * g + b


def _gelu(x):
    # tanh approximation of BERT's erf-GELU
    c = 0.7978845608028654  # sqrt(2/pi)
    return 0.5 * x * (1.0 + jnp.tanh(c * (x + 0.044715 * x * x * x)))


# --------------------------------- Pallas kernel ---------------------------------
def encoder_kernel(emb_ref, mask_ref, eg_ref, eb_ref,
                   wqkv_ref, bqkv_ref, wo_ref, bo_ref, ln1g_ref, ln1b_ref,
                   w1_ref, b1_ref, w2_ref, b2_ref, ln2g_ref, ln2b_ref,
                   y_ref):
    """One (batch-tile, layer) grid step; y_ref carries the activation across layers."""
    # first layer of each batch tile: fused embedding-sum LayerNorm seeds the carry
    @pl.when(pl.program_id(1) == 0)
    def _():
        y_ref[...] = _ln_padded(emb_ref[...], eg_ref[...], eb_ref[...])

    x = y_ref[...]                               # [S, HP] f32, padded lanes zero
    x16 = x.astype(jnp.bfloat16)
    mask = mask_ref[...]                         # [1, S] additive key mask

    # fused dense Q|K|V projection (1/sqrt(hd) folded into the Q columns/bias at pack time)
    qkv = jnp.dot(x16, wqkv_ref[...], preferred_element_type=jnp.float32) + bqkv_ref[...]
    qkv16 = qkv.astype(jnp.bfloat16)             # [S, QKVP]; cols [0,3H) real, head-dense

    ctx = []
    for h in range(NH):                          # static loop over DENSE heads (no lane padding)
        q = qkv16[:, h * HD:(h + 1) * HD]
        k = qkv16[:, H + h * HD:H + (h + 1) * HD]
        v = qkv16[:, 2 * H + h * HD:2 * H + (h + 1) * HD]
        s = jnp.einsum("qd,kd->qk", q, k, preferred_element_type=jnp.float32) + mask
        s = s - jnp.max(s, axis=-1, keepdims=True)
        p = jnp.exp(s)
        p = p * pl.reciprocal(jnp.sum(p, axis=-1, keepdims=True), approx=True)
        ctx.append(jnp.einsum("qk,kd->qd", p.astype(jnp.bfloat16), v,
                              preferred_element_type=jnp.float32))
    ctx = jnp.concatenate(ctx, axis=-1)          # [S, H] head-dense context

    attn = jnp.dot(ctx.astype(jnp.bfloat16), wo_ref[...],
                   preferred_element_type=jnp.float32) + bo_ref[...]
    h1 = _ln_padded(x + attn, ln1g_ref[...], ln1b_ref[...])

    f = _gelu(jnp.dot(h1.astype(jnp.bfloat16), w1_ref[...],
                      preferred_element_type=jnp.float32) + b1_ref[...])
    f = jnp.dot(f.astype(jnp.bfloat16), w2_ref[...],
                preferred_element_type=jnp.float32) + b2_ref[...]
    y_ref[...] = _ln_padded(h1 + f, ln2g_ref[...], ln2b_ref[...])


# --------------------------------- Pallas wrapper ---------------------------------
_WEIGHT_NAMES = ("wqkv", "bqkv", "wo", "bo", "ln1g", "ln1b",
                 "w1", "b1", "w2", "b2", "ln2g", "ln2b")


def bert_encoder_forward(token_ids, token_type_ids, attention_mask, packed):
    """BERT text-encoder forward: returns last_hidden_state [B, S, H]."""
    Bn, Sn = token_ids.shape

    # --- XLA glue: embedding gathers + pre-sum into ONE activation input ---
    emb = (packed["word_emb"][token_ids]
           + packed["pos_emb"][None, :Sn]
           + packed["type_emb"][token_type_ids])                     # [B, S, HP] f32

    # additive key mask as a tiny [B, 1, S] vector (broadcast to [S, S] inside the kernel)
    add_mask = ((1.0 - attention_mask.astype(jnp.float32)) * -1e9)[:, None, :]

    weights = [packed[n] for n in _WEIGHT_NAMES]

    in_specs = [
        pl.BlockSpec((pl.Squeezed(), Sn, HP), lambda b, l: (b, 0, 0)),  # emb (read at l==0)
        pl.BlockSpec((pl.Squeezed(), 1, Sn), lambda b, l: (b, 0, 0)),   # additive key mask
        pl.BlockSpec((1, HP), lambda b, l: (0, 0)),                     # emb LN gamma
        pl.BlockSpec((1, HP), lambda b, l: (0, 0)),                     # emb LN beta
    ]
    # per-layer weights: leading L axis squeezed; index_map selects layer l (double-buffered)
    for w in weights:
        in_specs.append(pl.BlockSpec((pl.Squeezed(),) + w.shape[1:],
                                     lambda b, l: (l, 0, 0)))

    y = pl.pallas_call(
        encoder_kernel,
        grid=(Bn, L),                                                   # (batch tile, layer)
        in_specs=in_specs,
        out_specs=pl.BlockSpec((pl.Squeezed(), Sn, HP), lambda b, l: (b, 0, 0)),
        out_shape=jax.ShapeDtypeStruct((Bn, Sn, HP), jnp.float32),
        compiler_params=pltpu.CompilerParams(
            # batch tiles are independent -> megacore sharding on v7x; layers are the
            # sequential carry axis.
            dimension_semantics=("parallel", "arbitrary"),
            vmem_limit_bytes=48 * 1024 * 1024),
    )(emb, add_mask, packed["emb_g"], packed["emb_b"], *weights)

    return y[:, :, :H]   # == txt_feat = out[0] (last_hidden_state)


# --------------------------------- parameter packing ---------------------------------
def _pad2(a, rows, cols):
    out = jnp.zeros((rows, cols), jnp.float32)
    return out.at[:a.shape[0], :a.shape[1]].set(a)


def pack_params(params):
    """Build the lane-padded, head-dense, layer-stacked weights for the Pallas kernel."""
    inv_scale = 1.0 / (HD ** 0.5)
    bf16 = jnp.bfloat16
    packed = {
        "word_emb": _pad2(params["word_emb"], V, HP),
        "pos_emb": _pad2(params["pos_emb"], S, HP),
        "type_emb": _pad2(params["type_emb"], 2, HP),
        "emb_g": _pad2(params["emb_ln_g"], 1, HP),
        "emb_b": _pad2(params["emb_ln_b"], 1, HP),
    }
    stacks = {n: [] for n in _WEIGHT_NAMES}
    for p in params["layers"]:
        # fused dense Q|K|V: cols [0,H)=Q (pre-scaled), [H,2H)=K, [2H,3H)=V, rest zero-pad.
        # Heads stay contiguous/dense (no per-head lane padding).
        wqkv = jnp.zeros((HP, QKVP), jnp.float32)
        wqkv = wqkv.at[:H, 0:H].set(p["wq"] * inv_scale)
        wqkv = wqkv.at[:H, H:2 * H].set(p["wk"])
        wqkv = wqkv.at[:H, 2 * H:3 * H].set(p["wv"])
        bqkv = jnp.zeros((1, QKVP), jnp.float32)
        bqkv = bqkv.at[:, 0:H].set(p["bq"] * inv_scale)
        bqkv = bqkv.at[:, H:2 * H].set(p["bk"])
        bqkv = bqkv.at[:, 2 * H:3 * H].set(p["bv"])

        stacks["wqkv"].append(wqkv.astype(bf16))
        stacks["bqkv"].append(bqkv)
        stacks["wo"].append(_pad2(p["wo"], H, HP).astype(bf16))    # [32, 128]
        stacks["bo"].append(_pad2(p["bo"], 1, HP))
        stacks["ln1g"].append(_pad2(p["ln1_g"], 1, HP))
        stacks["ln1b"].append(_pad2(p["ln1_b"], 1, HP))
        stacks["w1"].append(_pad2(p["w1"], HP, IP).astype(bf16))
        stacks["b1"].append(_pad2(p["b1"], 1, IP))
        stacks["w2"].append(_pad2(p["w2"], IP, HP).astype(bf16))
        stacks["b2"].append(_pad2(p["b2"], 1, HP))
        stacks["ln2g"].append(_pad2(p["ln2_g"], 1, HP))
        stacks["ln2b"].append(_pad2(p["ln2_b"], 1, HP))
    for n in _WEIGHT_NAMES:
        packed[n] = jnp.stack(stacks[n], axis=0)   # [L, ...]
    return packed


# --------------------------------- pure-JAX reference ---------------------------------
def _ref_layer(x, add_mask, p):
    Bn, Sn, Hn = x.shape
    q = x @ p["wq"] + p["bq"]
    k = x @ p["wk"] + p["bk"]
    v = x @ p["wv"] + p["bv"]

    def heads(t):
        return t.reshape(Bn, Sn, NH, HD).transpose(0, 2, 1, 3)   # [B, nh, S, hd]

    qh, kh, vh = heads(q), heads(k), heads(v)
    s = jnp.einsum("bhqd,bhkd->bhqk", qh, kh) / (HD ** 0.5)
    s = s + add_mask[:, :, None, :]
    a = jax.nn.softmax(s, axis=-1)
    ctx = jnp.einsum("bhqk,bhkd->bhqd", a, vh).transpose(0, 2, 1, 3).reshape(Bn, Sn, Hn)
    attn = ctx @ p["wo"] + p["bo"]
    h1 = _layernorm_ref(x + attn, p["ln1_g"], p["ln1_b"])
    f = _gelu(h1 @ p["w1"] + p["b1"]) @ p["w2"] + p["b2"]
    return _layernorm_ref(h1 + f, p["ln2_g"], p["ln2_b"])


def ref_forward(token_ids, token_type_ids, attention_mask, params):
    we = params["word_emb"][token_ids]
    pe = params["pos_emb"][jnp.arange(token_ids.shape[1])][None]
    te = params["type_emb"][token_type_ids]
    x = _layernorm_ref(we + pe + te, params["emb_ln_g"], params["emb_ln_b"])
    add_mask = (1.0 - attention_mask.astype(jnp.float32)) * -1e9
    add_mask = add_mask[:, None, :]
    for lyr in params["layers"]:
        x = _ref_layer(x, add_mask, lyr)
    return x


# --------------------------------- parameter init ---------------------------------
def init_params(key):
    ks = iter(jax.random.split(key, 8 + L * 16))
    std = 0.02

    def w(shape):
        return jax.random.normal(next(ks), shape, jnp.float32) * std

    params = {
        "word_emb": w((V, H)),
        "pos_emb": w((S, H)),
        "type_emb": w((2, H)),
        "emb_ln_g": jnp.ones((1, H), jnp.float32),
        "emb_ln_b": jnp.zeros((1, H), jnp.float32),
        "layers": [],
    }
    for _ in range(L):
        params["layers"].append({
            "wq": w((H, H)), "bq": w((1, H)),
            "wk": w((H, H)), "bk": w((1, H)),
            "wv": w((H, H)), "bv": w((1, H)),
            "wo": w((H, H)), "bo": w((1, H)),
            "ln1_g": jnp.ones((1, H), jnp.float32), "ln1_b": jnp.zeros((1, H), jnp.float32),
            "w1": w((H, I)), "b1": w((1, I)),
            "w2": w((I, H)), "b2": w((1, H)),
            "ln2_g": jnp.ones((1, H), jnp.float32), "ln2_b": jnp.zeros((1, H), jnp.float32),
        })
    return params


# ------------------------------------- main -------------------------------------
if __name__ == "__main__":
    key = jax.random.PRNGKey(0)
    kp, kt = jax.random.split(key)

    params = init_params(kp)
    packed = pack_params(params)

    # synthetic "tokenized" batch (the HF tokenizer itself is not translatable)
    token_ids = jax.random.randint(kt, (B, S), 0, V, dtype=jnp.int32)
    token_type_ids = jnp.zeros((B, S), jnp.int32)
    txt_len = jnp.array([S, 5], jnp.int32)
    attention_mask = (jnp.arange(S)[None, :] < txt_len[:, None]).astype(jnp.int32)

    txt_feat = bert_encoder_forward(token_ids, token_type_ids, attention_mask, packed)
    txt_feat = jax.block_until_ready(txt_feat)

    ref = ref_forward(token_ids, token_type_ids, attention_mask, params)
    assert txt_feat.shape == (B, S, H)
    # bf16 MXU operands + EUP approx reciprocal in softmax -> looser tolerance vs the f32 ref
    err = float(jnp.max(jnp.abs(txt_feat - ref)))
    assert err < 3e-2, f"mismatch vs JAX reference (max abs err {err})"

    print("KERNEL_OK")
</pallas_src>

<mosaic_0001>
module attributes {stable_mosaic.version = 11 : i64} {
  func.func @encoder_kernel(%arg0: i32, %arg1: i32, %arg2: memref<1x8x128xf32, #tpu.memory_space<vmem>>, %arg3: memref<1x1x8xf32, #tpu.memory_space<vmem>>, %arg4: memref<1x128xf32, #tpu.memory_space<vmem>>, %arg5: memref<1x128xf32, #tpu.memory_space<vmem>>, %arg6: memref<1x128x128xbf16, #tpu.memory_space<vmem>>, %arg7: memref<1x1x128xf32, #tpu.memory_space<vmem>>, %arg8: memref<1x32x128xbf16, #tpu.memory_space<vmem>>, %arg9: memref<1x1x128xf32, #tpu.memory_space<vmem>>, %arg10: memref<1x1x128xf32, #tpu.memory_space<vmem>>, %arg11: memref<1x1x128xf32, #tpu.memory_space<vmem>>, %arg12: memref<1x128x128xbf16, #tpu.memory_space<vmem>>, %arg13: memref<1x1x128xf32, #tpu.memory_space<vmem>>, %arg14: memref<1x128x128xbf16, #tpu.memory_space<vmem>>, %arg15: memref<1x1x128xf32, #tpu.memory_space<vmem>>, %arg16: memref<1x1x128xf32, #tpu.memory_space<vmem>>, %arg17: memref<1x1x128xf32, #tpu.memory_space<vmem>>, %arg18: memref<1x8x128xf32, #tpu.memory_space<vmem>>) attributes {dimension_semantics = [#tpu.dimension_semantics<parallel>, #tpu.dimension_semantics<arbitrary>], iteration_bounds = array<i64: 2, 2>, scalar_prefetch = 0 : i64, scratch_operands = 0 : i64, tpu.core_type = #tpu.core_type<tc>, window_params = [{transform_indices = @transform_0, window_bounds = array<i64: 1, 8, 128>}, {transform_indices = @transform_1, window_bounds = array<i64: 1, 1, 8>}, {pipeline_mode = #tpu.pipeline_mode<synchronous>, transform_indices = @transform_2, window_bounds = array<i64: 1, 128>}, {pipeline_mode = #tpu.pipeline_mode<synchronous>, transform_indices = @transform_3, window_bounds = array<i64: 1, 128>}, {transform_indices = @transform_4, window_bounds = array<i64: 1, 128, 128>}, {transform_indices = @transform_5, window_bounds = array<i64: 1, 1, 128>}, {transform_indices = @transform_6, window_bounds = array<i64: 1, 32, 128>}, {transform_indices = @transform_7, window_bounds = array<i64: 1, 1, 128>}, {transform_indices = @transform_8, window_bounds = array<i64: 1, 1, 128>}, {transform_indices = @transform_9, window_bounds = array<i64: 1, 1, 128>}, {transform_indices = @transform_10, window_bounds = array<i64: 1, 128, 128>}, {transform_indices = @transform_11, window_bounds = array<i64: 1, 1, 128>}, {transform_indices = @transform_12, window_bounds = array<i64: 1, 128, 128>}, {transform_indices = @transform_13, window_bounds = array<i64: 1, 1, 128>}, {transform_indices = @transform_14, window_bounds = array<i64: 1, 1, 128>}, {transform_indices = @transform_15, window_bounds = array<i64: 1, 1, 128>}, {transform_indices = @transform_16, window_bounds = array<i64: 1, 8, 128>}]} {
    %c0_i32 = arith.constant 0 : i32
    %0 = arith.cmpi eq, %arg1, %c0_i32 : i32
    %1 = arith.extui %0 : i1 to i32
    %c0_i32_0 = arith.constant 0 : i32
    %2 = arith.cmpi ne, %1, %c0_i32_0 : i32
    scf.if %2 {
      %c0_80 = arith.constant 0 : index
      %c0_81 = arith.constant 0 : index
      %c0_82 = arith.constant 0 : index
      %187 = vector.load %arg2[%c0_80, %c0_81, %c0_82] : memref<1x8x128xf32, #tpu.memory_space<vmem>>, vector<1x8x128xf32>
      %188 = vector.shape_cast %187 : vector<1x8x128xf32> to vector<8x128xf32>
      %c0_83 = arith.constant 0 : index
      %c0_84 = arith.constant 0 : index
      %189 = vector.load %arg4[%c0_83, %c0_84] : memref<1x128xf32, #tpu.memory_space<vmem>>, vector<1x128xf32>
      %c0_85 = arith.constant 0 : index
      %c0_86 = arith.constant 0 : index
      %190 = vector.load %arg5[%c0_85, %c0_86] : memref<1x128xf32, #tpu.memory_space<vmem>>, vector<1x128xf32>
      %cst_87 = arith.constant dense<0.000000e+00> : vector<8xf32>
      %191 = vector.multi_reduction <add>, %188, %cst_87 [1] : vector<8x128xf32> to vector<8xf32>
      %192 = vector.shape_cast %191 : vector<8xf32> to vector<8x1xf32>
      %cst_88 = arith.constant 3.125000e-02 : f32
      %193 = vector.broadcast %cst_88 : f32 to vector<8x1xf32>
      %194 = arith.mulf %192, %193 : vector<8x1xf32>
      %195 = arith.mulf %188, %188 : vector<8x128xf32>
      %cst_89 = arith.constant dense<0.000000e+00> : vector<8xf32>
      %196 = vector.multi_reduction <add>, %195, %cst_89 [1] : vector<8x128xf32> to vector<8xf32>
      %197 = vector.shape_cast %196 : vector<8xf32> to vector<8x1xf32>
      %cst_90 = arith.constant 3.125000e-02 : f32
      %198 = vector.broadcast %cst_90 : f32 to vector<8x1xf32>
      %199 = arith.mulf %197, %198 : vector<8x1xf32>
      %200 = arith.mulf %194, %194 : vector<8x1xf32>
      %201 = arith.subf %199, %200 : vector<8x1xf32>
      %cst_91 = arith.constant 0.000000e+00 : f32
      %202 = vector.broadcast %cst_91 : f32 to vector<8x1xf32>
      %203 = arith.maximumf %201, %202 : vector<8x1xf32>
      %204 = vector.broadcast %194 : vector<8x1xf32> to vector<8x128xf32>
      %205 = arith.subf %188, %204 : vector<8x128xf32>
      %cst_92 = arith.constant 9.99999996E-13 : f32
      %206 = vector.broadcast %cst_92 : f32 to vector<8x1xf32>
      %207 = arith.addf %203, %206 : vector<8x1xf32>
      %208 = math.rsqrt %207 : vector<8x1xf32>
      %209 = vector.broadcast %208 : vector<8x1xf32> to vector<8x128xf32>
      %210 = arith.mulf %205, %209 : vector<8x128xf32>
      %211 = vector.broadcast %189 : vector<1x128xf32> to vector<8x128xf32>
      %212 = arith.mulf %210, %211 : vector<8x128xf32>
      %213 = vector.broadcast %190 : vector<1x128xf32> to vector<8x128xf32>
      %214 = arith.addf %212, %213 : vector<8x128xf32>
      %c0_93 = arith.constant 0 : index
      %c0_94 = arith.constant 0 : index
      %c0_95 = arith.constant 0 : index
      %215 = vector.load %arg18[%c0_93, %c0_94, %c0_95] : memref<1x8x128xf32, #tpu.memory_space<vmem>>, vector<1x8x128xf32>
      %216 = vector.shape_cast %215 : vector<1x8x128xf32> to vector<8x128xf32>
      %217 = vector.shape_cast %214 : vector<8x128xf32> to vector<1x8x128xf32>
      tpu.vector_store %arg18[%c0_93, %c0_94, %c0_95], %217 {strides = array<i32>} : memref<1x8x128xf32, #tpu.memory_space<vmem>>, vector<1x8x128xf32>,
    } else {
    }
    %c0 = arith.constant 0 : index
    %c0_1 = arith.constant 0 : index
    %c0_2 = arith.constant 0 : index
    %3 = vector.load %arg18[%c0, %c0_1, %c0_2] : memref<1x8x128xf32, #tpu.memory_space<vmem>>, vector<1x8x128xf32>
    %4 = vector.shape_cast %3 : vector<1x8x128xf32> to vector<8x128xf32>
    %5 = arith.truncf %4 : vector<8x128xf32> to vector<8x128xbf16>
    %c0_3 = arith.constant 0 : index
    %c0_4 = arith.constant 0 : index
    %c0_5 = arith.constant 0 : index
    %6 = vector.load %arg3[%c0_3, %c0_4, %c0_5] : memref<1x1x8xf32, #tpu.memory_space<vmem>>, vector<1x1x8xf32>
    %7 = vector.shape_cast %6 : vector<1x1x8xf32> to vector<1x8xf32>
    %c0_6 = arith.constant 0 : index
    %c0_7 = arith.constant 0 : index
    %c0_8 = arith.constant 0 : index
    %8 = vector.load %arg6[%c0_6, %c0_7, %c0_8] : memref<1x128x128xbf16, #tpu.memory_space<vmem>>, vector<1x128x128xbf16>
    %9 = vector.shape_cast %8 : vector<1x128x128xbf16> to vector<128x128xbf16>
    %cst = arith.constant dense<0.000000e+00> : vector<8x128xf32>
    %10 = tpu.matmul %5, %9, %cst {dimension_numbers = #tpu.dot_dimension_numbers<[1], [0], [0], [1], [0, 0, 1, 1], [], []>} : vector<8x128xbf16>, vector<128x128xbf16>, vector<8x128xf32> -> vector<8x128xf32>
    %c0_9 = arith.constant 0 : index
    %c0_10 = arith.constant 0 : index
    %c0_11 = arith.constant 0 : index
    %11 = vector.load %arg7[%c0_9, %c0_10, %c0_11] : memref<1x1x128xf32, #tpu.memory_space<vmem>>, vector<1x1x128xf32>
    %12 = vector.shape_cast %11 : vector<1x1x128xf32> to vector<1x128xf32>
    %13 = vector.broadcast %12 : vector<1x128xf32> to vector<8x128xf32>
    %14 = arith.addf %10, %13 : vector<8x128xf32>
    %15 = arith.truncf %14 : vector<8x128xf32> to vector<8x128xbf16>
    %16 = vector.extract_strided_slice %15 {offsets = [0, 0], sizes = [8, 8], strides = [1, 1]} : vector<8x128xbf16> to vector<8x8xbf16>
    %17 = vector.extract_strided_slice %15 {offsets = [0, 32], sizes = [8, 8], strides = [1, 1]} : vector<8x128xbf16> to vector<8x8xbf16>
    %18 = vector.extract_strided_slice %15 {offsets = [0, 64], sizes = [8, 8], strides = [1, 1]} : vector<8x128xbf16> to vector<8x8xbf16>
    "tpu.trace_start"() <{level = 10 : i32, message = "qd,kd->qk"}> : () -> ()
    %cst_12 = arith.constant dense<0.000000e+00> : vector<8x8xf32>
    %19 = tpu.matmul %16, %17, %cst_12 {dimension_numbers = #tpu.dot_dimension_numbers<[1], [1], [0], [0], [0, 0, 1, 0], [], []>} : vector<8x8xbf16>, vector<8x8xbf16>, vector<8x8xf32> -> vector<8x8xf32>
    "tpu.trace_stop"() : () -> ()
    %20 = vector.broadcast %7 : vector<1x8xf32> to vector<8x8xf32>
    %21 = arith.addf %19, %20 : vector<8x8xf32>
    %cst_13 = arith.constant dense<0xFF800000> : vector<8xf32>
    %22 = vector.multi_reduction <maximumf>, %21, %cst_13 [1] : vector<8x8xf32> to vector<8xf32>
    %23 = vector.shape_cast %22 : vector<8xf32> to vector<8x1xf32>
    %24 = vector.broadcast %23 : vector<8x1xf32> to vector<8x8xf32>
    %25 = arith.subf %21, %24 : vector<8x8xf32>
    %26 = math.exp %25 : vector<8x8xf32>
    %cst_14 = arith.constant dense<0.000000e+00> : vector<8xf32>
    %27 = vector.multi_reduction <add>, %26, %cst_14 [1] : vector<8x8xf32> to vector<8xf32>
    %28 = vector.shape_cast %27 : vector<8xf32> to vector<8x1xf32>
    %29 = tpu.reciprocal %28 {approx = true} : vector<8x1xf32> -> vector<8x1xf32>
    %30 = vector.broadcast %29 : vector<8x1xf32> to vector<8x8xf32>
    %31 = arith.mulf %26, %30 : vector<8x8xf32>
    %32 = arith.truncf %31 : vector<8x8xf32> to vector<8x8xbf16>
    "tpu.trace_start"() <{level = 10 : i32, message = "qk,kd->qd"}> : () -> ()
    %cst_15 = arith.constant dense<0.000000e+00> : vector<8x8xf32>
    %33 = tpu.matmul %32, %18, %cst_15 {dimension_numbers = #tpu.dot_dimension_numbers<[1], [0], [0], [1], [0, 0, 1, 1], [], []>} : vector<8x8xbf16>, vector<8x8xbf16>, vector<8x8xf32> -> vector<8x8xf32>
    "tpu.trace_stop"() : () -> ()
    %34 = vector.extract_strided_slice %15 {offsets = [0, 8], sizes = [8, 8], strides = [1, 1]} : vector<8x128xbf16> to vector<8x8xbf16>
    %35 = vector.extract_strided_slice %15 {offsets = [0, 40], sizes = [8, 8], strides = [1, 1]} : vector<8x128xbf16> to vector<8x8xbf16>
    %36 = vector.extract_strided_slice %15 {offsets = [0, 72], sizes = [8, 8], strides = [1, 1]} : vector<8x128xbf16> to vector<8x8xbf16>
    "tpu.trace_start"() <{level = 10 : i32, message = "qd,kd->qk"}> : () -> ()
    %cst_16 = arith.constant dense<0.000000e+00> : vector<8x8xf32>
    %37 = tpu.matmul %34, %35, %cst_16 {dimension_numbers = #tpu.dot_dimension_numbers<[1], [1], [0], [0], [0, 0, 1, 0], [], []>} : vector<8x8xbf16>, vector<8x8xbf16>, vector<8x8xf32> -> vector<8x8xf32>
    "tpu.trace_stop"() : () -> ()
    %38 = vector.broadcast %7 : vector<1x8xf32> to vector<8x8xf32>
    %39 = arith.addf %37, %38 : vector<8x8xf32>
    %cst_17 = arith.constant dense<0xFF800000> : vector<8xf32>
    %40 = vector.multi_reduction <maximumf>, %39, %cst_17 [1] : vector<8x8xf32> to vector<8xf32>
    %41 = vector.shape_cast %40 : vector<8xf32> to vector<8x1xf32>
    %42 = vector.broadcast %41 : vector<8x1xf32> to vector<8x8xf32>
    %43 = arith.subf %39, %42 : vector<8x8xf32>
    %44 = math.exp %43 : vector<8x8xf32>
    %cst_18 = arith.constant dense<0.000000e+00> : vector<8xf32>
    %45 = vector.multi_reduction <add>, %44, %cst_18 [1] : vector<8x8xf32> to vector<8xf32>
    %46 = vector.shape_cast %45 : vector<8xf32> to vector<8x1xf32>
    %47 = tpu.reciprocal %46 {approx = true} : vector<8x1xf32> -> vector<8x1xf32>
    %48 = vector.broadcast %47 : vector<8x1xf32> to vector<8x8xf32>
    %49 = arith.mulf %44, %48 : vector<8x8xf32>
    %50 = arith.truncf %49 : vector<8x8xf32> to vector<8x8xbf16>
    "tpu.trace_start"() <{level = 10 : i32, message = "qk,kd->qd"}> : () -> ()
    %cst_19 = arith.constant dense<0.000000e+00> : vector<8x8xf32>
    %51 = tpu.matmul %50, %36, %cst_19 {dimension_numbers = #tpu.dot_dimension_numbers<[1], [0], [0], [1], [0, 0, 1, 1], [], []>} : vector<8x8xbf16>, vector<8x8xbf16>, vector<8x8xf32> -> vector<8x8xf32>
    "tpu.trace_stop"() : () -> ()
    %52 = vector.extract_strided_slice %15 {offsets = [0, 16], sizes = [8, 8], strides = [1, 1]} : vector<8x128xbf16> to vector<8x8xbf16>
    %53 = vector.extract_strided_slice %15 {offsets = [0, 48], sizes = [8, 8], strides = [1, 1]} : vector<8x128xbf16> to vector<8x8xbf16>
    %54 = vector.extract_strided_slice %15 {offsets = [0, 80], sizes = [8, 8], strides = [1, 1]} : vector<8x128xbf16> to vector<8x8xbf16>
    "tpu.trace_start"() <{level = 10 : i32, message = "qd,kd->qk"}> : () -> ()
    %cst_20 = arith.constant dense<0.000000e+00> : vector<8x8xf32>
    %55 = tpu.matmul %52, %53, %cst_20 {dimension_numbers = #tpu.dot_dimension_numbers<[1], [1], [0], [0], [0, 0, 1, 0], [], []>} : vector<8x8xbf16>, vector<8x8xbf16>, vector<8x8xf32> -> vector<8x8xf32>
    "tpu.trace_stop"() : () -> ()
    %56 = vector.broadcast %7 : vector<1x8xf32> to vector<8x8xf32>
    %57 = arith.addf %55, %56 : vector<8x8xf32>
    %cst_21 = arith.constant dense<0xFF800000> : vector<8xf32>
    %58 = vector.multi_reduction <maximumf>, %57, %cst_21 [1] : vector<8x8xf32> to vector<8xf32>
    %59 = vector.shape_cast %58 : vector<8xf32> to vector<8x1xf32>
    %60 = vector.broadcast %59 : vector<8x1xf32> to vector<8x8xf32>
    %61 = arith.subf %57, %60 : vector<8x8xf32>
    %62 = math.exp %61 : vector<8x8xf32>
    %cst_22 = arith.constant dense<0.000000e+00> : vector<8xf32>
    %63 = vector.multi_reduction <add>, %62, %cst_22 [1] : vector<8x8xf32> to vector<8xf32>
    %64 = vector.shape_cast %63 : vector<8xf32> to vector<8x1xf32>
    %65 = tpu.reciprocal %64 {approx = true} : vector<8x1xf32> -> vector<8x1xf32>
    %66 = vector.broadcast %65 : vector<8x1xf32> to vector<8x8xf32>
    %67 = arith.mulf %62, %66 : vector<8x8xf32>
    %68 = arith.truncf %67 : vector<8x8xf32> to vector<8x8xbf16>
    "tpu.trace_start"() <{level = 10 : i32, message = "qk,kd->qd"}> : () -> ()
    %cst_23 = arith.constant dense<0.000000e+00> : vector<8x8xf32>
    %69 = tpu.matmul %68, %54, %cst_23 {dimension_numbers = #tpu.dot_dimension_numbers<[1], [0], [0], [1], [0, 0, 1, 1], [], []>} : vector<8x8xbf16>, vector<8x8xbf16>, vector<8x8xf32> -> vector<8x8xf32>
    "tpu.trace_stop"() : () -> ()
    %70 = vector.extract_strided_slice %15 {offsets = [0, 24], sizes = [8, 8], strides = [1, 1]} : vector<8x128xbf16> to vector<8x8xbf16>
    %71 = vector.extract_strided_slice %15 {offsets = [0, 56], sizes = [8, 8], strides = [1, 1]} : vector<8x128xbf16> to vector<8x8xbf16>
    %72 = vector.extract_strided_slice %15 {offsets = [0, 88], sizes = [8, 8], strides = [1, 1]} : vector<8x128xbf16> to vector<8x8xbf16>
    "tpu.trace_start"() <{level = 10 : i32, message = "qd,kd->qk"}> : () -> ()
    %cst_24 = arith.constant dense<0.000000e+00> : vector<8x8xf32>
    %73 = tpu.matmul %70, %71, %cst_24 {dimension_numbers = #tpu.dot_dimension_numbers<[1], [1], [0], [0], [0, 0, 1, 0], [], []>} : vector<8x8xbf16>, vector<8x8xbf16>, vector<8x8xf32> -> vector<8x8xf32>
    "tpu.trace_stop"() : () -> ()
    %74 = vector.broadcast %7 : vector<1x8xf32> to vector<8x8xf32>
    %75 = arith.addf %73, %74 : vector<8x8xf32>
    %cst_25 = arith.constant dense<0xFF800000> : vector<8xf32>
    %76 = vector.multi_reduction <maximumf>, %75, %cst_25 [1] : vector<8x8xf32> to vector<8xf32>
    %77 = vector.shape_cast %76 : vector<8xf32> to vector<8x1xf32>
    %78 = vector.broadcast %77 : vector<8x1xf32> to vector<8x8xf32>
    %79 = arith.subf %75, %78 : vector<8x8xf32>
    %80 = math.exp %79 : vector<8x8xf32>
    %cst_26 = arith.constant dense<0.000000e+00> : vector<8xf32>
    %81 = vector.multi_reduction <add>, %80, %cst_26 [1] : vector<8x8xf32> to vector<8xf32>
    %82 = vector.shape_cast %81 : vector<8xf32> to vector<8x1xf32>
    %83 = tpu.reciprocal %82 {approx = true} : vector<8x1xf32> -> vector<8x1xf32>
    %84 = vector.broadcast %83 : vector<8x1xf32> to vector<8x8xf32>
    %85 = arith.mulf %80, %84 : vector<8x8xf32>
    %86 = arith.truncf %85 : vector<8x8xf32> to vector<8x8xbf16>
    "tpu.trace_start"() <{level = 10 : i32, message = "qk,kd->qd"}> : () -> ()
    %cst_27 = arith.constant dense<0.000000e+00> : vector<8x8xf32>
    %87 = tpu.matmul %86, %72, %cst_27 {dimension_numbers = #tpu.dot_dimension_numbers<[1], [0], [0], [1], [0, 0, 1, 1], [], []>} : vector<8x8xbf16>, vector<8x8xbf16>, vector<8x8xf32> -> vector<8x8xf32>
    "tpu.trace_stop"() : () -> ()
    %88 = tpu.concatenate %33, %51, %69, %87 in 1 : vector<8x8xf32>, vector<8x8xf32>, vector<8x8xf32>, vector<8x8xf32> -> vector<8x32xf32>
    %89 = arith.truncf %88 : vector<8x32xf32> to vector<8x32xbf16>
    %c0_28 = arith.constant 0 : index
    %c0_29 = arith.constant 0 : index
    %c0_30 = arith.constant 0 : index
    %90 = vector.load %arg8[%c0_28, %c0_29, %c0_30] : memref<1x32x128xbf16, #tpu.memory_space<vmem>>, vector<1x32x128xbf16>
    %91 = vector.shape_cast %90 : vector<1x32x128xbf16> to vector<32x128xbf16>
    %cst_31 = arith.constant dense<0.000000e+00> : vector<8x128xf32>
    %92 = tpu.matmul %89, %91, %cst_31 {dimension_numbers = #tpu.dot_dimension_numbers<[1], [0], [0], [1], [0, 0, 1, 1], [], []>} : vector<8x32xbf16>, vector<32x128xbf16>, vector<8x128xf32> -> vector<8x128xf32>
    %c0_32 = arith.constant 0 : index
    %c0_33 = arith.constant 0 : index
    %c0_34 = arith.constant 0 : index
    %93 = vector.load %arg9[%c0_32, %c0_33, %c0_34] : memref<1x1x128xf32, #tpu.memory_space<vmem>>, vector<1x1x128xf32>
    %94 = vector.shape_cast %93 : vector<1x1x128xf32> to vector<1x128xf32>
    %95 = vector.broadcast %94 : vector<1x128xf32> to vector<8x128xf32>
    %96 = arith.addf %92, %95 : vector<8x128xf32>
    %97 = arith.addf %4, %96 : vector<8x128xf32>
    %c0_35 = arith.constant 0 : index
    %c0_36 = arith.constant 0 : index
    %c0_37 = arith.constant 0 : index
    %98 = vector.load %arg10[%c0_35, %c0_36, %c0_37] : memref<1x1x128xf32, #tpu.memory_space<vmem>>, vector<1x1x128xf32>
    %99 = vector.shape_cast %98 : vector<1x1x128xf32> to vector<1x128xf32>
    %c0_38 = arith.constant 0 : index
    %c0_39 = arith.constant 0 : index
    %c0_40 = arith.constant 0 : index
    %100 = vector.load %arg11[%c0_38, %c0_39, %c0_40] : memref<1x1x128xf32, #tpu.memory_space<vmem>>, vector<1x1x128xf32>
    %101 = vector.shape_cast %100 : vector<1x1x128xf32> to vector<1x128xf32>
    %cst_41 = arith.constant dense<0.000000e+00> : vector<8xf32>
    %102 = vector.multi_reduction <add>, %97, %cst_41 [1] : vector<8x128xf32> to vector<8xf32>
    %103 = vector.shape_cast %102 : vector<8xf32> to vector<8x1xf32>
    %cst_42 = arith.constant 3.125000e-02 : f32
    %104 = vector.broadcast %cst_42 : f32 to vector<8x1xf32>
    %105 = arith.mulf %103, %104 : vector<8x1xf32>
    %106 = arith.mulf %97, %97 : vector<8x128xf32>
    %cst_43 = arith.constant dense<0.000000e+00> : vector<8xf32>
    %107 = vector.multi_reduction <add>, %106, %cst_43 [1] : vector<8x128xf32> to vector<8xf32>
    %108 = vector.shape_cast %107 : vector<8xf32> to vector<8x1xf32>
    %cst_44 = arith.constant 3.125000e-02 : f32
    %109 = vector.broadcast %cst_44 : f32 to vector<8x1xf32>
    %110 = arith.mulf %108, %109 : vector<8x1xf32>
    %111 = arith.mulf %105, %105 : vector<8x1xf32>
    %112 = arith.subf %110, %111 : vector<8x1xf32>
    %cst_45 = arith.constant 0.000000e+00 : f32
    %113 = vector.broadcast %cst_45 : f32 to vector<8x1xf32>
    %114 = arith.maximumf %112, %113 : vector<8x1xf32>
    %115 = vector.broadcast %105 : vector<8x1xf32> to vector<8x128xf32>
    %116 = arith.subf %97, %115 : vector<8x128xf32>
    %cst_46 = arith.constant 9.99999996E-13 : f32
    %117 = vector.broadcast %cst_46 : f32 to vector<8x1xf32>
    %118 = arith.addf %114, %117 : vector<8x1xf32>
    %119 = math.rsqrt %118 : vector<8x1xf32>
    %120 = vector.broadcast %119 : vector<8x1xf32> to vector<8x128xf32>
    %121 = arith.mulf %116, %120 : vector<8x128xf32>
    %122 = vector.broadcast %99 : vector<1x128xf32> to vector<8x128xf32>
    %123 = arith.mulf %121, %122 : vector<8x128xf32>
    %124 = vector.broadcast %101 : vector<1x128xf32> to vector<8x128xf32>
    %125 = arith.addf %123, %124 : vector<8x128xf32>
    %126 = arith.truncf %125 : vector<8x128xf32> to vector<8x128xbf16>
    %c0_47 = arith.constant 0 : index
    %c0_48 = arith.constant 0 : index
    %c0_49 = arith.constant 0 : index
    %127 = vector.load %arg12[%c0_47, %c0_48, %c0_49] : memref<1x128x128xbf16, #tpu.memory_space<vmem>>, vector<1x128x128xbf16>
    %128 = vector.shape_cast %127 : vector<1x128x128xbf16> to vector<128x128xbf16>
    %cst_50 = arith.constant dense<0.000000e+00> : vector<8x128xf32>
    %129 = tpu.matmul %126, %128, %cst_50 {dimension_numbers = #tpu.dot_dimension_numbers<[1], [0], [0], [1], [0, 0, 1, 1], [], []>} : vector<8x128xbf16>, vector<128x128xbf16>, vector<8x128xf32> -> vector<8x128xf32>
    %c0_51 = arith.constant 0 : index
    %c0_52 = arith.constant 0 : index
    %c0_53 = arith.constant 0 : index
    %130 = vector.load %arg13[%c0_51, %c0_52, %c0_53] : memref<1x1x128xf32, #tpu.memory_space<vmem>>, vector<1x1x128xf32>
    %131 = vector.shape_cast %130 : vector<1x1x128xf32> to vector<1x128xf32>
    %132 = vector.broadcast %131 : vector<1x128xf32> to vector<8x128xf32>
    %133 = arith.addf %129, %132 : vector<8x128xf32>
    %cst_54 = arith.constant 5.000000e-01 : f32
    %134 = vector.broadcast %cst_54 : f32 to vector<8x128xf32>
    %135 = arith.mulf %134, %133 : vector<8x128xf32>
    %cst_55 = arith.constant 4.471500e-02 : f32
    %136 = vector.broadcast %cst_55 : f32 to vector<8x128xf32>
    %137 = arith.mulf %136, %133 : vector<8x128xf32>
    %138 = arith.mulf %137, %133 : vector<8x128xf32>
    %139 = arith.mulf %138, %133 : vector<8x128xf32>
    %140 = arith.addf %133, %139 : vector<8x128xf32>
    %cst_56 = arith.constant 0.797884583 : f32
    %141 = vector.broadcast %cst_56 : f32 to vector<8x128xf32>
    %142 = arith.mulf %141, %140 : vector<8x128xf32>
    %143 = math.tanh %142 : vector<8x128xf32>
    %cst_57 = arith.constant 1.000000e+00 : f32
    %144 = vector.broadcast %cst_57 : f32 to vector<8x128xf32>
    %145 = arith.addf %144, %143 : vector<8x128xf32>
    %146 = arith.mulf %135, %145 : vector<8x128xf32>
    %147 = arith.truncf %146 : vector<8x128xf32> to vector<8x128xbf16>
    %c0_58 = arith.constant 0 : index
    %c0_59 = arith.constant 0 : index
    %c0_60 = arith.constant 0 : index
    %148 = vector.load %arg14[%c0_58, %c0_59, %c0_60] : memref<1x128x128xbf16, #tpu.memory_space<vmem>>, vector<1x128x128xbf16>
    %149 = vector.shape_cast %148 : vector<1x128x128xbf16> to vector<128x128xbf16>
    %cst_61 = arith.constant dense<0.000000e+00> : vector<8x128xf32>
    %150 = tpu.matmul %147, %149, %cst_61 {dimension_numbers = #tpu.dot_dimension_numbers<[1], [0], [0], [1], [0, 0, 1, 1], [], []>} : vector<8x128xbf16>, vector<128x128xbf16>, vector<8x128xf32> -> vector<8x128xf32>
    %c0_62 = arith.constant 0 : index
    %c0_63 = arith.constant 0 : index
    %c0_64 = arith.constant 0 : index
    %151 = vector.load %arg15[%c0_62, %c0_63, %c0_64] : memref<1x1x128xf32, #tpu.memory_space<vmem>>, vector<1x1x128xf32>
    %152 = vector.shape_cast %151 : vector<1x1x128xf32> to vector<1x128xf32>
    %153 = vector.broadcast %152 : vector<1x128xf32> to vector<8x128xf32>
    %154 = arith.addf %150, %153 : vector<8x128xf32>
    %155 = arith.addf %125, %154 : vector<8x128xf32>
    %c0_65 = arith.constant 0 : index
    %c0_66 = arith.constant 0 : index
    %c0_67 = arith.constant 0 : index
    %156 = vector.load %arg16[%c0_65, %c0_66, %c0_67] : memref<1x1x128xf32, #tpu.memory_space<vmem>>, vector<1x1x128xf32>
    %157 = vector.shape_cast %156 : vector<1x1x128xf32> to vector<1x128xf32>
    %c0_68 = arith.constant 0 : index
    %c0_69 = arith.constant 0 : index
    %c0_70 = arith.constant 0 : index
    %158 = vector.load %arg17[%c0_68, %c0_69, %c0_70] : memref<1x1x128xf32, #tpu.memory_space<vmem>>, vector<1x1x128xf32>
    %159 = vector.shape_cast %158 : vector<1x1x128xf32> to vector<1x128xf32>
    %cst_71 = arith.constant dense<0.000000e+00> : vector<8xf32>
    %160 = vector.multi_reduction <add>, %155, %cst_71 [1] : vector<8x128xf32> to vector<8xf32>
    %161 = vector.shape_cast %160 : vector<8xf32> to vector<8x1xf32>
    %cst_72 = arith.constant 3.125000e-02 : f32
    %162 = vector.broadcast %cst_72 : f32 to vector<8x1xf32>
    %163 = arith.mulf %161, %162 : vector<8x1xf32>
    %164 = arith.mulf %155, %155 : vector<8x128xf32>
    %cst_73 = arith.constant dense<0.000000e+00> : vector<8xf32>
    %165 = vector.multi_reduction <add>, %164, %cst_73 [1] : vector<8x128xf32> to vector<8xf32>
    %166 = vector.shape_cast %165 : vector<8xf32> to vector<8x1xf32>
    %cst_74 = arith.constant 3.125000e-02 : f32
    %167 = vector.broadcast %cst_74 : f32 to vector<8x1xf32>
    %168 = arith.mulf %166, %167 : vector<8x1xf32>
    %169 = arith.mulf %163, %163 : vector<8x1xf32>
    %170 = arith.subf %168, %169 : vector<8x1xf32>
    %cst_75 = arith.constant 0.000000e+00 : f32
    %171 = vector.broadcast %cst_75 : f32 to vector<8x1xf32>
    %172 = arith.maximumf %170, %171 : vector<8x1xf32>
    %173 = vector.broadcast %163 : vector<8x1xf32> to vector<8x128xf32>
    %174 = arith.subf %155, %173 : vector<8x128xf32>
    %cst_76 = arith.constant 9.99999996E-13 : f32
    %175 = vector.broadcast %cst_76 : f32 to vector<8x1xf32>
    %176 = arith.addf %172, %175 : vector<8x1xf32>
    %177 = math.rsqrt %176 : vector<8x1xf32>
    %178 = vector.broadcast %177 : vector<8x1xf32> to vector<8x128xf32>
    %179 = arith.mulf %174, %178 : vector<8x128xf32>
    %180 = vector.broadcast %157 : vector<1x128xf32> to vector<8x128xf32>
    %181 = arith.mulf %179, %180 : vector<8x128xf32>
    %182 = vector.broadcast %159 : vector<1x128xf32> to vector<8x128xf32>
    %183 = arith.addf %181, %182 : vector<8x128xf32>
    %c0_77 = arith.constant 0 : index
    %c0_78 = arith.constant 0 : index
    %c0_79 = arith.constant 0 : index
    %184 = vector.load %arg18[%c0_77, %c0_78, %c0_79] : memref<1x8x128xf32, #tpu.memory_space<vmem>>, vector<1x8x128xf32>
    %185 = vector.shape_cast %184 : vector<1x8x128xf32> to vector<8x128xf32>
    %186 = vector.shape_cast %183 : vector<8x128xf32> to vector<1x8x128xf32>
    tpu.vector_store %arg18[%c0_77, %c0_78, %c0_79], %186 {strides = array<i32>} : memref<1x8x128xf32, #tpu.memory_space<vmem>>, vector<1x8x128xf32>,
    return
  }
  func.func @transform_0(%arg0: i32, %arg1: i32) -> (i32, i32, i32) {
    %c0_i32 = arith.constant 0 : i32
    %c0_i32_0 = arith.constant 0 : i32
    %c0_i32_1 = arith.constant 0 : i32
    return %arg0, %c0_i32, %c0_i32_0 : i32, i32, i32
  }
  func.func @transform_1(%arg0: i32, %arg1: i32) -> (i32, i32, i32) {
    %c0_i32 = arith.constant 0 : i32
    %c0_i32_0 = arith.constant 0 : i32
    %c0_i32_1 = arith.constant 0 : i32
    return %arg0, %c0_i32, %c0_i32_0 : i32, i32, i32
  }
  func.func @transform_2(%arg0: i32, %arg1: i32) -> (i32, i32) {
    %c0_i32 = arith.constant 0 : i32
    %c0_i32_0 = arith.constant 0 : i32
    %c0_i32_1 = arith.constant 0 : i32
    return %c0_i32, %c0_i32_0 : i32, i32
  }
  func.func @transform_3(%arg0: i32, %arg1: i32) -> (i32, i32) {
    %c0_i32 = arith.constant 0 : i32
    %c0_i32_0 = arith.constant 0 : i32
    %c0_i32_1 = arith.constant 0 : i32
    return %c0_i32, %c0_i32_0 : i32, i32
  }
  func.func @transform_4(%arg0: i32, %arg1: i32) -> (i32, i32, i32) {
    %c0_i32 = arith.constant 0 : i32
    %c0_i32_0 = arith.constant 0 : i32
    %c0_i32_1 = arith.constant 0 : i32
    return %arg1, %c0_i32, %c0_i32_0 : i32, i32, i32
  }
  func.func @transform_5(%arg0: i32, %arg1: i32) -> (i32, i32, i32) {
    %c0_i32 = arith.constant 0 : i32
    %c0_i32_0 = arith.constant 0 : i32
    %c0_i32_1 = arith.constant 0 : i32
    return %arg1, %c0_i32, %c0_i32_0 : i32, i32, i32
  }
  func.func @transform_6(%arg0: i32, %arg1: i32) -> (i32, i32, i32) {
    %c0_i32 = arith.constant 0 : i32
    %c0_i32_0 = arith.constant 0 : i32
    %c0_i32_1 = arith.constant 0 : i32
    return %arg1, %c0_i32, %c0_i32_0 : i32, i32, i32
  }
  func.func @transform_7(%arg0: i32, %arg1: i32) -> (i32, i32, i32) {
    %c0_i32 = arith.constant 0 : i32
    %c0_i32_0 = arith.constant 0 : i32
    %c0_i32_1 = arith.constant 0 : i32
    return %arg1, %c0_i32, %c0_i32_0 : i32, i32, i32
  }
  func.func @transform_8(%arg0: i32, %arg1: i32) -> (i32, i32, i32) {
    %c0_i32 = arith.constant 0 : i32
    %c0_i32_0 = arith.constant 0 : i32
    %c0_i32_1 = arith.constant 0 : i32
    return %arg1, %c0_i32, %c0_i32_0 : i32, i32, i32
  }
  func.func @transform_9(%arg0: i32, %arg1: i32) -> (i32, i32, i32) {
    %c0_i32 = arith.constant 0 : i32
    %c0_i32_0 = arith.constant 0 : i32
    %c0_i32_1 = arith.constant 0 : i32
    return %arg1, %c0_i32, %c0_i32_0 : i32, i32, i32
  }
  func.func @transform_10(%arg0: i32, %arg1: i32) -> (i32, i32, i32) {
    %c0_i32 = arith.constant 0 : i32
    %c0_i32_0 = arith.constant 0 : i32
    %c0_i32_1 = arith.constant 0 : i32
    return %arg1, %c0_i32, %c0_i32_0 : i32, i32, i32
  }
  func.func @transform_11(%arg0: i32, %arg1: i32) -> (i32, i32, i32) {
    %c0_i32 = arith.constant 0 : i32
    %c0_i32_0 = arith.constant 0 : i32
    %c0_i32_1 = arith.constant 0 : i32
    return %arg1, %c0_i32, %c0_i32_0 : i32, i32, i32
  }
  func.func @transform_12(%arg0: i32, %arg1: i32) -> (i32, i32, i32) {
    %c0_i32 = arith.constant 0 : i32
    %c0_i32_0 = arith.constant 0 : i32
    %c0_i32_1 = arith.constant 0 : i32
    return %arg1, %c0_i32, %c0_i32_0 : i32, i32, i32
  }
  func.func @transform_13(%arg0: i32, %arg1: i32) -> (i32, i32, i32) {
    %c0_i32 = arith.constant 0 : i32
    %c0_i32_0 = arith.constant 0 : i32
    %c0_i32_1 = arith.constant 0 : i32
    return %arg1, %c0_i32, %c0_i32_0 : i32, i32, i32
  }
  func.func @transform_14(%arg0: i32, %arg1: i32) -> (i32, i32, i32) {
    %c0_i32 = arith.constant 0 : i32
    %c0_i32_0 = arith.constant 0 : i32
    %c0_i32_1 = arith.constant 0 : i32
    return %arg1, %c0_i32, %c0_i32_0 : i32, i32, i32
  }
  func.func @transform_15(%arg0: i32, %arg1: i32) -> (i32, i32, i32) {
    %c0_i32 = arith.constant 0 : i32
    %c0_i32_0 = arith.constant 0 : i32
    %c0_i32_1 = arith.constant 0 : i32
    return %arg1, %c0_i32, %c0_i32_0 : i32, i32, i32
  }
  func.func @transform_16(%arg0: i32, %arg1: i32) -> (i32, i32, i32) {
    %c0_i32 = arith.constant 0 : i32
    %c0_i32_0 = arith.constant 0 : i32
    %c0_i32_1 = arith.constant 0 : i32
    return %arg0, %c0_i32, %c0_i32_0 : i32, i32, i32
  }
}

</mosaic_0001>

<llo_original>
// kernel: tpu_custom_call.1
$region0: #{tpu_custom_call.1}
  #allocation0 [shape = 'u32[]', space=smem, size = 0x4, offset = 0x4, fixed_abs, tag = 'smem constant byte address 0x4 - core index']
  #allocation1 [shape = 'u32[144,128]{1,0:T(1,128)}', space=vmem, size = 0x12000, scoped, tag = 'internal scratch']
  %s0 = inlined_call_operand.hbm [shape: f32[2,8,128], index: 0, kind: input, shape index: {}]
  %s1 = inlined_call_operand.vmem [shape: f32[2,1,8], index: 1, kind: input, shape index: {}]
  %s2 = inlined_call_operand.hbm [shape: f32[1,128], index: 2, kind: input, shape index: {}]
  %s3 = inlined_call_operand.hbm [shape: f32[1,128], index: 3, kind: input, shape index: {}]
  %s4 = inlined_call_operand.hbm [shape: bf16[2,128,128], index: 4, kind: input, shape index: {}]
  %s5 = inlined_call_operand.vmem [shape: f32[2,1,128], index: 5, kind: input, shape index: {}]
  %s6 = inlined_call_operand.hbm [shape: bf16[2,32,128], index: 6, kind: input, shape index: {}]
  %s7 = inlined_call_operand.vmem [shape: f32[2,1,128], index: 7, kind: input, shape index: {}]
  %s8 = inlined_call_operand.vmem [shape: f32[2,1,128], index: 8, kind: input, shape index: {}]
  %s9 = inlined_call_operand.vmem [shape: f32[2,1,128], index: 9, kind: input, shape index: {}]
  %s10 = inlined_call_operand.hbm [shape: bf16[2,128,128], index: 10, kind: input, shape index: {}]
  %s11 = inlined_call_operand.vmem [shape: f32[2,1,128], index: 11, kind: input, shape index: {}]
  %s12 = inlined_call_operand.hbm [shape: bf16[2,128,128], index: 12, kind: input, shape index: {}]
  %s13 = inlined_call_operand.vmem [shape: f32[2,1,128], index: 13, kind: input, shape index: {}]
  %s14 = inlined_call_operand.vmem [shape: f32[2,1,128], index: 14, kind: input, shape index: {}]
  %s15 = inlined_call_operand.vmem [shape: f32[2,1,128], index: 15, kind: input, shape index: {}]
  %s16 = inlined_call_operand.hbm [shape: f32[2,8,128], index: 16, kind: output, shape index: {}]
  %s17 = sld [smem:[#allocation0]]
  $region129: #{tpu_custom_call.1} parent=0
    _
  %s19 = ssub.s32 1, %s17
  %s20 = scalar_select 0, %s19, %s17
  $region1: #{tpu_custom_call.1} parent=0
    #allocation2 [shape = 'u8[8192]{0}', space=vmem, size = 0x2000, scoped, tag = 'input window, operand 0']
    #allocation3 [shape = 's32[2]{0}', space=sflag, size = 0x8, scoped, tag = 'scoped memory for tpu_custom_call.1']
    #allocation4 [shape = 's32[2]{0}', space=sflag, size = 0x8, scoped, tag = 'scoped memory for tpu_custom_call.1']
    #allocation5 [shape = 'u8[512]{0}', space=vmem, size = 0x400, scoped, tag = 'input window, operand 2, single buffered']
    #allocation6 [shape = 's32[1]{0}', space=sflag, size = 0x4, scoped, tag = 'scoped memory for tpu_custom_call.1']
    #allocation7 [shape = 'u8[512]{0}', space=vmem, size = 0x400, scoped, tag = 'input window, operand 3, single buffered']
    #allocation8 [shape = 'u8[65536]{0}', space=vmem, size = 0x10000, scoped, tag = 'input window, operand 4']
    #allocation9 [shape = 's32[2]{0}', space=sflag, size = 0x8, scoped, tag = 'scoped memory for tpu_custom_call.1']
    #allocation10 [shape = 'u8[16384]{0}', space=vmem, size = 0x4000, scoped, tag = 'input window, operand 6']
    #allocation11 [shape = 'u8[65536]{0}', space=vmem, size = 0x10000, scoped, tag = 'input window, operand 10']
    #allocation12 [shape = 's32[2]{0}', space=sflag, size = 0x8, scoped, tag = 'scoped memory for tpu_custom_call.1']
    #allocation13 [shape = 'u8[65536]{0}', space=vmem, size = 0x10000, scoped, tag = 'input window, operand 12']
    #allocation14 [shape = 'u8[8192]{0}', space=vmem, size = 0x2000, scoped, tag = 'output window, operand 0']
    %21 = vsyncpa [#allocation3], 0
    %s22 = scalar_lea.sflag [#allocation3], 1
    %23 = vsyncpa %s22, 0
    %24 = vsyncpa [#allocation6], 0
    %25 = vsyncpa [#allocation9], 0
    %s26 = scalar_lea.sflag [#allocation9], 1
    %27 = vsyncpa %s26, 0
    %28 = vsyncpa [#allocation12], 0
    %s29 = scalar_lea.sflag [#allocation12], 1
    %30 = vsyncpa %s29, 0
    %31 = vsyncpa [#allocation4], 0
    %s32 = scalar_lea.sflag [#allocation4], 1
    %33 = vsyncpa %s32, 0
    loop: start=0, step=1, limit=6
    $region2: #{tpu_custom_call.1} parent=1 // loop_pre_header
      _
    $region3: #{tpu_custom_call.1} parent=1 // loop_header
      %s35 = sphi 0, %s39
      %p36 = scmp.ge.s32.totalorder %s35, 6
      %s42 = sphi 0, %s54
      %s43 = sphi 0, %s50
      %s44 = sphi 0, %s42
      %s45 = sphi 0, %s43
      %s46 = sphi 0, %s44
      %s47 = sphi 0, %s45
      %s57 = sphi 0, %s59
      %s60 = sphi 0, %s57
      %s61 = sphi 0, %s60
      %s77 = sphi 0, %s61
      %s83 = sphi 0, %s85
      %s86 = sphi 0, %s83
      %s87 = sphi 0, %s86
      %s103 = sphi 0, %s87
      %s107 = sphi 0, %s107
      %s109 = sphi 0, %s107
      %s110 = sphi 0, %s109
      %s124 = sphi 0, %s110
      %s128 = sphi 0, %s128
      %s130 = sphi 0, %s128
      %s131 = sphi 0, %s130
      %s145 = sphi 0, %s131
      %s151 = sphi 0, %s153
      %s154 = sphi 0, %s151
      %s155 = sphi 0, %s154
      %s171 = sphi 0, %s155
      %s177 = sphi 0, %s179
      %s180 = sphi 0, %s177
      %s181 = sphi 0, %s180
      %s197 = sphi 0, %s181
      %s203 = sphi 0, %s205
      %s206 = sphi 0, %s203
      %s207 = sphi 0, %s206
      %s223 = sphi 0, %s207
      %s229 = sphi 0, %s231
      %s232 = sphi 0, %s229
      %s233 = sphi 0, %s232
      %s249 = sphi 0, %s233
      %s255 = sphi 0, %s257
      %s258 = sphi 0, %s255
      %s259 = sphi 0, %s258
      %s275 = sphi 0, %s259
      %s281 = sphi 0, %s283
      %s284 = sphi 0, %s281
      %s285 = sphi 0, %s284
      %s301 = sphi 0, %s285
      %s307 = sphi 0, %s309
      %s310 = sphi 0, %s307
      %s311 = sphi 0, %s310
      %s327 = sphi 0, %s311
      %s333 = sphi 0, %s335
      %s336 = sphi 0, %s333
      %s337 = sphi 0, %s336
      %s353 = sphi 0, %s337
      %s359 = sphi 0, %s361
      %s362 = sphi 0, %s359
      %s363 = sphi 0, %s362
      %s379 = sphi 0, %s363
      %s385 = sphi 0, %s387
      %s388 = sphi 0, %s385
      %s389 = sphi 0, %s388
      %s405 = sphi 0, %s389
      %s411 = sphi 0, %s413
      %s414 = sphi 0, %s411
      %s415 = sphi 0, %s414
      %s431 = sphi 0, %s415
      %s437 = sphi 0, %s439
      %s440 = sphi 0, %s437
      %s441 = sphi 0, %s440
      %s457 = sphi 0, %s441
      %s463 = sphi 0, %s465
      %s466 = sphi 0, %s463
      %s467 = sphi 0, %s466
      %s483 = sphi 0, %s467
    $region4: #{tpu_custom_call.1} parent=1 // loop_header_branch
      %38 = sbr.rel (%p36) target = $region8
    $region5: #{tpu_custom_call.1} parent=1 // loop_body
      %s40 = ssub.s32 %s35, 1
      %s41 = ssub.s32 %s35, 2
      %s48 = sadd.s32 1, %s43
      %p49 = scmp.ge.s32.totalorder %s48, 2
      %s50 = scalar_select %p49, 0, %s48
      %s51 = sadd.s32 1, %s42
      %s52 = scalar_select %p49, %s51, %s42
      %p53 = scmp.ge.s32.totalorder %s52, 2
      %s54 = scalar_select %p53, 0, %s52
      %s55 = ssub.s32 %s42, %s54
      %p56 = scmp.eq.s32.totalorder %s55, 0
      %s58 = sadd.s32 %s57, 1
      %s59 = scalar_select %p56, %s57, %s58
      %p62 = pneg %p56
      %p63 = scmp.eq.s32.totalorder %s35, 3
      %p64 = por %p62, %p63
      %p65 = scmp.ne.s32.totalorder %s57, %s60
      %p66 = scmp.eq.s32.totalorder %s35, 0
      %p67 = por %p65, %p66
      %p68 = scmp.ne.s32.totalorder %s57, %s60
      %p69 = scmp.eq.s32.totalorder %s40, 3
      %p70 = por %p68, %p69
      %p71 = scmp.ne.s32.totalorder %s60, %s61
      %p72 = scmp.eq.s32.totalorder %s40, 0
      %p73 = por %p71, %p72
      %p74 = scmp.ne.s32.totalorder %s60, %s61
      %p75 = scmp.eq.s32.totalorder %s41, 3
      %p76 = por %p74, %p75
      %p78 = scmp.ne.s32.totalorder %s61, %s77
      %p79 = scmp.eq.s32.totalorder %s41, 0
      %p80 = por %p78, %p79
      %s81 = ssub.s32 %s42, %s54
      %p82 = scmp.eq.s32.totalorder %s81, 0
      %s84 = sadd.s32 %s83, 1
      %s85 = scalar_select %p82, %s83, %s84
      %p88 = pneg %p82
      %p89 = scmp.eq.s32.totalorder %s35, 3
      %p90 = por %p88, %p89
      %p91 = scmp.ne.s32.totalorder %s83, %s86
      %p92 = scmp.eq.s32.totalorder %s35, 0
      %p93 = por %p91, %p92
      %p94 = scmp.ne.s32.totalorder %s83, %s86
      %p95 = scmp.eq.s32.totalorder %s40, 3
      %p96 = por %p94, %p95
      %p97 = scmp.ne.s32.totalorder %s86, %s87
      %p98 = scmp.eq.s32.totalorder %s40, 0
      %p99 = por %p97, %p98
      %p100 = scmp.ne.s32.totalorder %s86, %s87
      %p101 = scmp.eq.s32.totalorder %s41, 3
      %p102 = por %p100, %p101
      %p104 = scmp.ne.s32.totalorder %s87, %s103
      %p105 = scmp.eq.s32.totalorder %s41, 0
      %p106 = por %p104, %p105
      %s108 = sadd.s32 %s107, 1
      %p111 = scmp.eq.s32.totalorder %s35, 3
      %p112 = scmp.ne.s32.totalorder %s107, %s109
      %p113 = scmp.eq.s32.totalorder %s35, 0
      %p114 = por %p112, %p113
      %p115 = scmp.ne.s32.totalorder %s107, %s109
      %p116 = scmp.eq.s32.totalorder %s40, 3
      %p117 = por %p115, %p116
      %p118 = scmp.ne.s32.totalorder %s109, %s110
      %p119 = scmp.eq.s32.totalorder %s40, 0
      %p120 = por %p118, %p119
      %p121 = scmp.ne.s32.totalorder %s109, %s110
      %p122 = scmp.eq.s32.totalorder %s41, 3
      %p123 = por %p121, %p122
      %p125 = scmp.ne.s32.totalorder %s110, %s124
      %p126 = scmp.eq.s32.totalorder %s41, 0
      %p127 = por %p125, %p126
      %s129 = sadd.s32 %s128, 1
      %p132 = scmp.eq.s32.totalorder %s35, 3
      %p133 = scmp.ne.s32.totalorder %s128, %s130
      %p134 = scmp.eq.s32.totalorder %s35, 0
      %p135 = por %p133, %p134
      %p136 = scmp.ne.s32.totalorder %s128, %s130
      %p137 = scmp.eq.s32.totalorder %s40, 3
      %p138 = por %p136, %p137
      %p139 = scmp.ne.s32.totalorder %s130, %s131
      %p140 = scmp.eq.s32.totalorder %s40, 0
      %p141 = por %p139, %p140
      %p142 = scmp.ne.s32.totalorder %s130, %s131
      %p143 = scmp.eq.s32.totalorder %s41, 3
      %p144 = por %p142, %p143
      %p146 = scmp.ne.s32.totalorder %s131, %s145
      %p147 = scmp.eq.s32.totalorder %s41, 0
      %p148 = por %p146, %p147
      %s149 = ssub.s32 %s43, %s50
      %p150 = scmp.eq.s32.totalorder %s149, 0
      %s152 = sadd.s32 %s151, 1
      %s153 = scalar_select %p150, %s151, %s152
      %p156 = pneg %p150
      %p157 = scmp.eq.s32.totalorder %s35, 3
      %p158 = por %p156, %p157
      %p159 = scmp.ne.s32.totalorder %s151, %s154
      %p160 = scmp.eq.s32.totalorder %s35, 0
      %p161 = por %p159, %p160
      %p162 = scmp.ne.s32.totalorder %s151, %s154
      %p163 = scmp.eq.s32.totalorder %s40, 3
      %p164 = por %p162, %p163
      %p165 = scmp.ne.s32.totalorder %s154, %s155
      %p166 = scmp.eq.s32.totalorder %s40, 0
      %p167 = por %p165, %p166
      %p168 = scmp.ne.s32.totalorder %s154, %s155
      %p169 = scmp.eq.s32.totalorder %s41, 3
      %p170 = por %p168, %p169
      %p172 = scmp.ne.s32.totalorder %s155, %s171
      %p173 = scmp.eq.s32.totalorder %s41, 0
      %p174 = por %p172, %p173
      %s175 = ssub.s32 %s43, %s50
      %p176 = scmp.eq.s32.totalorder %s175, 0
      %s178 = sadd.s32 %s177, 1
      %s179 = scalar_select %p176, %s177, %s178
      %p182 = pneg %p176
      %p183 = scmp.eq.s32.totalorder %s35, 3
      %p184 = por %p182, %p183
      %p185 = scmp.ne.s32.totalorder %s177, %s180
      %p186 = scmp.eq.s32.totalorder %s35, 0
      %p187 = por %p185, %p186
      %p188 = scmp.ne.s32.totalorder %s177, %s180
      %p189 = scmp.eq.s32.totalorder %s40, 3
      %p190 = por %p188, %p189
      %p191 = scmp.ne.s32.totalorder %s180, %s181
      %p192 = scmp.eq.s32.totalorder %s40, 0
      %p193 = por %p191, %p192
      %p194 = scmp.ne.s32.totalorder %s180, %s181
      %p195 = scmp.eq.s32.totalorder %s41, 3
      %p196 = por %p194, %p195
      %p198 = scmp.ne.s32.totalorder %s181, %s197
      %p199 = scmp.eq.s32.totalorder %s41, 0
      %p200 = por %p198, %p199
      %s201 = ssub.s32 %s43, %s50
      %p202 = scmp.eq.s32.totalorder %s201, 0
      %s204 = sadd.s32 %s203, 1
      %s205 = scalar_select %p202, %s203, %s204
      %p208 = pneg %p202
      %p209 = scmp.eq.s32.totalorder %s35, 3
      %p210 = por %p208, %p209
      %p211 = scmp.ne.s32.totalorder %s203, %s206
      %p212 = scmp.eq.s32.totalorder %s35, 0
      %p213 = por %p211, %p212
      %p214 = scmp.ne.s32.totalorder %s203, %s206
      %p215 = scmp.eq.s32.totalorder %s40, 3
      %p216 = por %p214, %p215
      %p217 = scmp.ne.s32.totalorder %s206, %s207
      %p218 = scmp.eq.s32.totalorder %s40, 0
      %p219 = por %p217, %p218
      %p220 = scmp.ne.s32.totalorder %s206, %s207
      %p221 = scmp.eq.s32.totalorder %s41, 3
      %p222 = por %p220, %p221
      %p224 = scmp.ne.s32.totalorder %s207, %s223
      %p225 = scmp.eq.s32.totalorder %s41, 0
      %p226 = por %p224, %p225
      %s227 = ssub.s32 %s43, %s50
      %p228 = scmp.eq.s32.totalorder %s227, 0
      %s230 = sadd.s32 %s229, 1
      %s231 = scalar_select %p228, %s229, %s230
      %p234 = pneg %p228
      %p235 = scmp.eq.s32.totalorder %s35, 3
      %p236 = por %p234, %p235
      %p237 = scmp.ne.s32.totalorder %s229, %s232
      %p238 = scmp.eq.s32.totalorder %s35, 0
      %p239 = por %p237, %p238
      %p240 = scmp.ne.s32.totalorder %s229, %s232
      %p241 = scmp.eq.s32.totalorder %s40, 3
      %p242 = por %p240, %p241
      %p243 = scmp.ne.s32.totalorder %s232, %s233
      %p244 = scmp.eq.s32.totalorder %s40, 0
      %p245 = por %p243, %p244
      %p246 = scmp.ne.s32.totalorder %s232, %s233
      %p247 = scmp.eq.s32.totalorder %s41, 3
      %p248 = por %p246, %p247
      %p250 = scmp.ne.s32.totalorder %s233, %s249
      %p251 = scmp.eq.s32.totalorder %s41, 0
      %p252 = por %p250, %p251
      %s253 = ssub.s32 %s43, %s50
      %p254 = scmp.eq.s32.totalorder %s253, 0
      %s256 = sadd.s32 %s255, 1
      %s257 = scalar_select %p254, %s255, %s256
      %p260 = pneg %p254
      %p261 = scmp.eq.s32.totalorder %s35, 3
      %p262 = por %p260, %p261
      %p263 = scmp.ne.s32.totalorder %s255, %s258
      %p264 = scmp.eq.s32.totalorder %s35, 0
      %p265 = por %p263, %p264
      %p266 = scmp.ne.s32.totalorder %s255, %s258
      %p267 = scmp.eq.s32.totalorder %s40, 3
      %p268 = por %p266, %p267
      %p269 = scmp.ne.s32.totalorder %s258, %s259
      %p270 = scmp.eq.s32.totalorder %s40, 0
      %p271 = por %p269, %p270
      %p272 = scmp.ne.s32.totalorder %s258, %s259
      %p273 = scmp.eq.s32.totalorder %s41, 3
      %p274 = por %p272, %p273
      %p276 = scmp.ne.s32.totalorder %s259, %s275
      %p277 = scmp.eq.s32.totalorder %s41, 0
      %p278 = por %p276, %p277
      %s279 = ssub.s32 %s43, %s50
      %p280 = scmp.eq.s32.totalorder %s279, 0
      %s282 = sadd.s32 %s281, 1
      %s283 = scalar_select %p280, %s281, %s282
      %p286 = pneg %p280
      %p287 = scmp.eq.s32.totalorder %s35, 3
      %p288 = por %p286, %p287
      %p289 = scmp.ne.s32.totalorder %s281, %s284
      %p290 = scmp.eq.s32.totalorder %s35, 0
      %p291 = por %p289, %p290
      %p292 = scmp.ne.s32.totalorder %s281, %s284
      %p293 = scmp.eq.s32.totalorder %s40, 3
      %p294 = por %p292, %p293
      %p295 = scmp.ne.s32.totalorder %s284, %s285
      %p296 = scmp.eq.s32.totalorder %s40, 0
      %p297 = por %p295, %p296
      %p298 = scmp.ne.s32.totalorder %s284, %s285
      %p299 = scmp.eq.s32.totalorder %s41, 3
      %p300 = por %p298, %p299
      %p302 = scmp.ne.s32.totalorder %s285, %s301
      %p303 = scmp.eq.s32.totalorder %s41, 0
      %p304 = por %p302, %p303
      %s305 = ssub.s32 %s43, %s50
      %p306 = scmp.eq.s32.totalorder %s305, 0
      %s308 = sadd.s32 %s307, 1
      %s309 = scalar_select %p306, %s307, %s308
      %p312 = pneg %p306
      %p313 = scmp.eq.s32.totalorder %s35, 3
      %p314 = por %p312, %p313
      %p315 = scmp.ne.s32.totalorder %s307, %s310
      %p316 = scmp.eq.s32.totalorder %s35, 0
      %p317 = por %p315, %p316
      %p318 = scmp.ne.s32.totalorder %s307, %s310
      %p319 = scmp.eq.s32.totalorder %s40, 3
      %p320 = por %p318, %p319
      %p321 = scmp.ne.s32.totalorder %s310, %s311
      %p322 = scmp.eq.s32.totalorder %s40, 0
      %p323 = por %p321, %p322
      %p324 = scmp.ne.s32.totalorder %s310, %s311
      %p325 = scmp.eq.s32.totalorder %s41, 3
      %p326 = por %p324, %p325
      %p328 = scmp.ne.s32.totalorder %s311, %s327
      %p329 = scmp.eq.s32.totalorder %s41, 0
      %p330 = por %p328, %p329
      %s331 = ssub.s32 %s43, %s50
      %p332 = scmp.eq.s32.totalorder %s331, 0
      %s334 = sadd.s32 %s333, 1
      %s335 = scalar_select %p332, %s333, %s334
      %p338 = pneg %p332
      %p339 = scmp.eq.s32.totalorder %s35, 3
      %p340 = por %p338, %p339
      %p341 = scmp.ne.s32.totalorder %s333, %s336
      %p342 = scmp.eq.s32.totalorder %s35, 0
      %p343 = por %p341, %p342
      %p344 = scmp.ne.s32.totalorder %s333, %s336
      %p345 = scmp.eq.s32.totalorder %s40, 3
      %p346 = por %p344, %p345
      %p347 = scmp.ne.s32.totalorder %s336, %s337
      %p348 = scmp.eq.s32.totalorder %s40, 0
      %p349 = por %p347, %p348
      %p350 = scmp.ne.s32.totalorder %s336, %s337
      %p351 = scmp.eq.s32.totalorder %s41, 3
      %p352 = por %p350, %p351
      %p354 = scmp.ne.s32.totalorder %s337, %s353
      %p355 = scmp.eq.s32.totalorder %s41, 0
      %p356 = por %p354, %p355
      %s357 = ssub.s32 %s43, %s50
      %p358 = scmp.eq.s32.totalorder %s357, 0
      %s360 = sadd.s32 %s359, 1
      %s361 = scalar_select %p358, %s359, %s360
      %p364 = pneg %p358
      %p365 = scmp.eq.s32.totalorder %s35, 3
      %p366 = por %p364, %p365
      %p367 = scmp.ne.s32.totalorder %s359, %s362
      %p368 = scmp.eq.s32.totalorder %s35, 0
      %p369 = por %p367, %p368
      %p370 = scmp.ne.s32.totalorder %s359, %s362
      %p371 = scmp.eq.s32.totalorder %s40, 3
      %p372 = por %p370, %p371
      %p373 = scmp.ne.s32.totalorder %s362, %s363
      %p374 = scmp.eq.s32.totalorder %s40, 0
      %p375 = por %p373, %p374
      %p376 = scmp.ne.s32.totalorder %s362, %s363
      %p377 = scmp.eq.s32.totalorder %s41, 3
      %p378 = por %p376, %p377
      %p380 = scmp.ne.s32.totalorder %s363, %s379
      %p381 = scmp.eq.s32.totalorder %s41, 0
      %p382 = por %p380, %p381
      %s383 = ssub.s32 %s43, %s50
      %p384 = scmp.eq.s32.totalorder %s383, 0
      %s386 = sadd.s32 %s385, 1
      %s387 = scalar_select %p384, %s385, %s386
      %p390 = pneg %p384
      %p391 = scmp.eq.s32.totalorder %s35, 3
      %p392 = por %p390, %p391
      %p393 = scmp.ne.s32.totalorder %s385, %s388
      %p394 = scmp.eq.s32.totalorder %s35, 0
      %p395 = por %p393, %p394
      %p396 = scmp.ne.s32.totalorder %s385, %s388
      %p397 = scmp.eq.s32.totalorder %s40, 3
      %p398 = por %p396, %p397
      %p399 = scmp.ne.s32.totalorder %s388, %s389
      %p400 = scmp.eq.s32.totalorder %s40, 0
      %p401 = por %p399, %p400
      %p402 = scmp.ne.s32.totalorder %s388, %s389
      %p403 = scmp.eq.s32.totalorder %s41, 3
      %p404 = por %p402, %p403
      %p406 = scmp.ne.s32.totalorder %s389, %s405
      %p407 = scmp.eq.s32.totalorder %s41, 0
      %p408 = por %p406, %p407
      %s409 = ssub.s32 %s43, %s50
      %p410 = scmp.eq.s32.totalorder %s409, 0
      %s412 = sadd.s32 %s411, 1
      %s413 = scalar_select %p410, %s411, %s412
      %p416 = pneg %p410
      %p417 = scmp.eq.s32.totalorder %s35, 3
      %p418 = por %p416, %p417
      %p419 = scmp.ne.s32.totalorder %s411, %s414
      %p420 = scmp.eq.s32.totalorder %s35, 0
      %p421 = por %p419, %p420
      %p422 = scmp.ne.s32.totalorder %s411, %s414
      %p423 = scmp.eq.s32.totalorder %s40, 3
      %p424 = por %p422, %p423
      %p425 = scmp.ne.s32.totalorder %s414, %s415
      %p426 = scmp.eq.s32.totalorder %s40, 0
      %p427 = por %p425, %p426
      %p428 = scmp.ne.s32.totalorder %s414, %s415
      %p429 = scmp.eq.s32.totalorder %s41, 3
      %p430 = por %p428, %p429
      %p432 = scmp.ne.s32.totalorder %s415, %s431
      %p433 = scmp.eq.s32.totalorder %s41, 0
      %p434 = por %p432, %p433
      %s435 = ssub.s32 %s43, %s50
      %p436 = scmp.eq.s32.totalorder %s435, 0
      %s438 = sadd.s32 %s437, 1
      %s439 = scalar_select %p436, %s437, %s438
      %p442 = pneg %p436
      %p443 = scmp.eq.s32.totalorder %s35, 3
      %p444 = por %p442, %p443
      %p445 = scmp.ne.s32.totalorder %s437, %s440
      %p446 = scmp.eq.s32.totalorder %s35, 0
      %p447 = por %p445, %p446
      %p448 = scmp.ne.s32.totalorder %s437, %s440
      %p449 = scmp.eq.s32.totalorder %s40, 3
      %p450 = por %p448, %p449
      %p451 = scmp.ne.s32.totalorder %s440, %s441
      %p452 = scmp.eq.s32.totalorder %s40, 0
      %p453 = por %p451, %p452
      %p454 = scmp.ne.s32.totalorder %s440, %s441
      %p455 = scmp.eq.s32.totalorder %s41, 3
      %p456 = por %p454, %p455
      %p458 = scmp.ne.s32.totalorder %s441, %s457
      %p459 = scmp.eq.s32.totalorder %s41, 0
      %p460 = por %p458, %p459
      %s461 = ssub.s32 %s42, %s54
      %p462 = scmp.eq.s32.totalorder %s461, 0
      %s464 = sadd.s32 %s463, 1
      %s465 = scalar_select %p462, %s463, %s464
      %p468 = pneg %p462
      %p469 = scmp.eq.s32.totalorder %s35, 3
      %p470 = por %p468, %p469
      %p471 = scmp.ne.s32.totalorder %s463, %s466
      %p472 = scmp.eq.s32.totalorder %s35, 0
      %p473 = por %p471, %p472
      %p474 = scmp.ne.s32.totalorder %s463, %s466
      %p475 = scmp.eq.s32.totalorder %s40, 3
      %p476 = por %p474, %p475
      %p477 = scmp.ne.s32.totalorder %s466, %s467
      %p478 = scmp.eq.s32.totalorder %s40, 0
      %p479 = por %p477, %p478
      %p480 = scmp.ne.s32.totalorder %s466, %s467
      %p481 = scmp.eq.s32.totalorder %s41, 3
      %p482 = por %p480, %p481
      %p484 = scmp.ne.s32.totalorder %s467, %s483
      %p485 = scmp.eq.s32.totalorder %s41, 0
      %p486 = por %p484, %p485
      %p487 = scmp.le.s32.totalorder 1, %s35
      %p488 = scmp.lt.s32.totalorder %s35, 5
      %p489 = pnand %p487, %p488
      %p490 = pneg %p489
      // Predicated region
      $region9: #{tpu_custom_call.1} parent=5 // pred_check
        _
      $region10: #{tpu_custom_call.1} parent=5 // pred_check_branch
        %492 = sbr.rel (%p489) target = $region12
      $region11: #{tpu_custom_call.1} parent=5 // pred_region
        %s493 = ssub.s32 %s35, 1
        // Predicated region
        $region13: #{tpu_custom_call.1} parent=11 // pred_check
          %p494 = pneg %p120
        $region14: #{tpu_custom_call.1} parent=11 // pred_check_branch
          %496 = sbr.rel (%p494) target = $region16
        $region15: #{tpu_custom_call.1} parent=11 // pred_region
          %s498 = ssub.s32 16, 16
          %499 = vsyncadd [#allocation6], %s498
          %s501 = sshll.u32 [#allocation5], 4
          %s502 = int_to_ptr.vmem [resolvable:$true] %s501
          %504 = dma.hbm_to_vmem [thread:$0]  %s2, 16, %s502, [#allocation6]
        $region16: #{tpu_custom_call.1} parent=11 // pred_fallthru
          _
        // Predicated region
        $region17: #{tpu_custom_call.1} parent=11 // pred_check
          %p505 = pneg %p141
        $region18: #{tpu_custom_call.1} parent=11 // pred_check_branch
          %507 = sbr.rel (%p505) target = $region20
        $region19: #{tpu_custom_call.1} parent=11 // pred_region
          %s509 = ssub.s32 16, 16
          %510 = vsyncadd [#allocation6], %s509
          %s512 = sshll.u32 [#allocation7], 4
          %s513 = int_to_ptr.vmem [resolvable:$true] %s512
          %515 = dma.hbm_to_vmem [thread:$0]  %s3, 16, %s513, [#allocation6]
        $region20: #{tpu_custom_call.1} parent=11 // pred_fallthru
          _
      $region12: #{tpu_custom_call.1} parent=5 // pred_fallthru
        _
      %p516 = scmp.lt.s32.totalorder %s35, 4
      // Predicated region
      $region21: #{tpu_custom_call.1} parent=5 // pred_check
        %p517 = pneg %p516
      $region22: #{tpu_custom_call.1} parent=5 // pred_check_branch
        %519 = sbr.rel (%p517) target = $region24
      $region23: #{tpu_custom_call.1} parent=5 // pred_region
        // Predicated region
        $region25: #{tpu_custom_call.1} parent=23 // pred_check
          %p520 = pneg %p67
        $region26: #{tpu_custom_call.1} parent=23 // pred_check_branch
          %522 = sbr.rel (%p520) target = $region28
        $region27: #{tpu_custom_call.1} parent=23 // pred_region
          %s523 = sand.u32 %s57, 1
          %s524 = scalar_lea.sflag [#allocation3], %s523
          %s525 = sand.u32 %s57, 1
          %s526 = smul.addr %s525, 8
          %s527 = scalar_lea.vmem [#allocation2], %s526
          %s529 = ssub.s32 128, 128
          %530 = vsyncadd %s524, %s529
          %s531 = smul.addr %s42, 128
          %s532 = scalar_lea.hbm %s0, %s531
          %s534 = sshll.u32 %s527, 4
          %s535 = int_to_ptr.vmem [resolvable:$true] %s534
          %537 = dma.hbm_to_vmem [thread:$0]  %s532, 128, %s535, %s524
        $region28: #{tpu_custom_call.1} parent=23 // pred_fallthru
          _
        // Predicated region
        $region29: #{tpu_custom_call.1} parent=23 // pred_check
          %p538 = pneg %p93
        $region30: #{tpu_custom_call.1} parent=23 // pred_check_branch
          %540 = sbr.rel (%p538) target = $region32
        $region31: #{tpu_custom_call.1} parent=23 // pred_region
          %p541 = scmp.lt.s32.totalorder %s42, 1
          %s542 = scalar_select %p541, %s42, 1
          %s543 = scalar_lea.vmem %s1, %s542
        $region32: #{tpu_custom_call.1} parent=23 // pred_fallthru
          _
        // Predicated region
        $region33: #{tpu_custom_call.1} parent=23 // pred_check
          %p544 = pneg %p161
        $region34: #{tpu_custom_call.1} parent=23 // pred_check_branch
          %546 = sbr.rel (%p544) target = $region36
        $region35: #{tpu_custom_call.1} parent=23 // pred_region
          %s547 = sand.u32 %s35, 1
          %s548 = scalar_lea.sflag [#allocation9], %s547
          %s549 = sand.u32 %s151, 1
          %s550 = smul.addr %s549, 64
          %s551 = scalar_lea.vmem [#allocation8], %s550
          %s553 = ssub.s32 1024, 1024
          %554 = vsyncadd %s548, %s553
          %s555 = smul.addr %s43, 16
          %s556 = smul.addr %s555, 64
          %s557 = scalar_lea.hbm %s4, %s556
          %s558 = sshll.u32 %s551, 4
          %s559 = int_to_ptr.vmem [resolvable:$true] %s558
          %564 = dma.hbm_to_vmem [thread:$0]  %s557, 1024, %s559, %s548, 64, 64, 4
        $region36: #{tpu_custom_call.1} parent=23 // pred_fallthru
          _
        // Predicated region
        $region37: #{tpu_custom_call.1} parent=23 // pred_check
          %p565 = pneg %p187
        $region38: #{tpu_custom_call.1} parent=23 // pred_check_branch
          %567 = sbr.rel (%p565) target = $region40
        $region39: #{tpu_custom_call.1} parent=23 // pred_region
          %p568 = scmp.lt.s32.totalorder %s43, 1
          %s569 = scalar_select %p568, %s43, 1
          %s570 = scalar_lea.vmem %s5, %s569
        $region40: #{tpu_custom_call.1} parent=23 // pred_fallthru
          _
        // Predicated region
        $region41: #{tpu_custom_call.1} parent=23 // pred_check
          %p571 = pneg %p213
        $region42: #{tpu_custom_call.1} parent=23 // pred_check_branch
          %573 = sbr.rel (%p571) target = $region44
        $region43: #{tpu_custom_call.1} parent=23 // pred_region
          %s574 = sand.u32 %s35, 1
          %s575 = scalar_lea.sflag [#allocation9], %s574
          %s576 = sand.u32 %s203, 1
          %s577 = smul.addr %s576, 16
          %s578 = scalar_lea.vmem [#allocation10], %s577
          %s580 = ssub.s32 256, 256
          %581 = vsyncadd %s575, %s580
          %s582 = smul.addr %s43, 4
          %s583 = smul.addr %s582, 64
          %s584 = scalar_lea.hbm %s6, %s583
          %s585 = sshll.u32 %s578, 4
          %s586 = int_to_ptr.vmem [resolvable:$true] %s585
          %591 = dma.hbm_to_vmem [thread:$0]  %s584, 256, %s586, %s575, 64, 64, 4
        $region44: #{tpu_custom_call.1} parent=23 // pred_fallthru
          _
        // Predicated region
        $region45: #{tpu_custom_call.1} parent=23 // pred_check
          %p592 = pneg %p239
        $region46: #{tpu_custom_call.1} parent=23 // pred_check_branch
          %594 = sbr.rel (%p592) target = $region48
        $region47: #{tpu_custom_call.1} parent=23 // pred_region
          %p595 = scmp.lt.s32.totalorder %s43, 1
          %s596 = scalar_select %p595, %s43, 1
          %s597 = scalar_lea.vmem %s7, %s596
        $region48: #{tpu_custom_call.1} parent=23 // pred_fallthru
          _
        // Predicated region
        $region49: #{tpu_custom_call.1} parent=23 // pred_check
          %p598 = pneg %p265
        $region50: #{tpu_custom_call.1} parent=23 // pred_check_branch
          %600 = sbr.rel (%p598) target = $region52
        $region51: #{tpu_custom_call.1} parent=23 // pred_region
          %p601 = scmp.lt.s32.totalorder %s43, 1
          %s602 = scalar_select %p601, %s43, 1
          %s603 = scalar_lea.vmem %s8, %s602
        $region52: #{tpu_custom_call.1} parent=23 // pred_fallthru
          _
        // Predicated region
        $region53: #{tpu_custom_call.1} parent=23 // pred_check
          %p604 = pneg %p291
        $region54: #{tpu_custom_call.1} parent=23 // pred_check_branch
          %606 = sbr.rel (%p604) target = $region56
        $region55: #{tpu_custom_call.1} parent=23 // pred_region
          %p607 = scmp.lt.s32.totalorder %s43, 1
          %s608 = scalar_select %p607, %s43, 1
          %s609 = scalar_lea.vmem %s9, %s608
        $region56: #{tpu_custom_call.1} parent=23 // pred_fallthru
          _
        // Predicated region
        $region57: #{tpu_custom_call.1} parent=23 // pred_check
          %p610 = pneg %p317
        $region58: #{tpu_custom_call.1} parent=23 // pred_check_branch
          %612 = sbr.rel (%p610) target = $region60
        $region59: #{tpu_custom_call.1} parent=23 // pred_region
          %s613 = sand.u32 %s35, 1
          %s614 = scalar_lea.sflag [#allocation12], %s613
          %s615 = sand.u32 %s307, 1
          %s616 = smul.addr %s615, 64
          %s617 = scalar_lea.vmem [#allocation11], %s616
          %s619 = ssub.s32 1024, 1024
          %620 = vsyncadd %s614, %s619
          %s621 = smul.addr %s43, 16
          %s622 = smul.addr %s621, 64
          %s623 = scalar_lea.hbm %s10, %s622
          %s624 = sshll.u32 %s617, 4
          %s625 = int_to_ptr.vmem [resolvable:$true] %s624
          %630 = dma.hbm_to_vmem [thread:$0]  %s623, 1024, %s625, %s614, 64, 64, 4
        $region60: #{tpu_custom_call.1} parent=23 // pred_fallthru
          _
        // Predicated region
        $region61: #{tpu_custom_call.1} parent=23 // pred_check
          %p631 = pneg %p343
        $region62: #{tpu_custom_call.1} parent=23 // pred_check_branch
          %633 = sbr.rel (%p631) target = $region64
        $region63: #{tpu_custom_call.1} parent=23 // pred_region
          %p634 = scmp.lt.s32.totalorder %s43, 1
          %s635 = scalar_select %p634, %s43, 1
          %s636 = scalar_lea.vmem %s11, %s635
        $region64: #{tpu_custom_call.1} parent=23 // pred_fallthru
          _
        // Predicated region
        $region65: #{tpu_custom_call.1} parent=23 // pred_check
          %p637 = pneg %p369
        $region66: #{tpu_custom_call.1} parent=23 // pred_check_branch
          %639 = sbr.rel (%p637) target = $region68
        $region67: #{tpu_custom_call.1} parent=23 // pred_region
          %s640 = sand.u32 %s35, 1
          %s641 = scalar_lea.sflag [#allocation12], %s640
          %s642 = sand.u32 %s359, 1
          %s643 = smul.addr %s642, 64
          %s644 = scalar_lea.vmem [#allocation13], %s643
          %s646 = ssub.s32 1024, 1024
          %647 = vsyncadd %s641, %s646
          %s648 = smul.addr %s43, 16
          %s649 = smul.addr %s648, 64
          %s650 = scalar_lea.hbm %s12, %s649
          %s651 = sshll.u32 %s644, 4
          %s652 = int_to_ptr.vmem [resolvable:$true] %s651
          %657 = dma.hbm_to_vmem [thread:$0]  %s650, 1024, %s652, %s641, 64, 64, 4
        $region68: #{tpu_custom_call.1} parent=23 // pred_fallthru
          _
        // Predicated region
        $region69: #{tpu_custom_call.1} parent=23 // pred_check
          %p658 = pneg %p395
        $region70: #{tpu_custom_call.1} parent=23 // pred_check_branch
          %660 = sbr.rel (%p658) target = $region72
        $region71: #{tpu_custom_call.1} parent=23 // pred_region
          %p661 = scmp.lt.s32.totalorder %s43, 1
          %s662 = scalar_select %p661, %s43, 1
          %s663 = scalar_lea.vmem %s13, %s662
        $region72: #{tpu_custom_call.1} parent=23 // pred_fallthru
          _
        // Predicated region
        $region73: #{tpu_custom_call.1} parent=23 // pred_check
          %p664 = pneg %p421
        $region74: #{tpu_custom_call.1} parent=23 // pred_check_branch
          %666 = sbr.rel (%p664) target = $region76
        $region75: #{tpu_custom_call.1} parent=23 // pred_region
          %p667 = scmp.lt.s32.totalorder %s43, 1
          %s668 = scalar_select %p667, %s43, 1
          %s669 = scalar_lea.vmem %s14, %s668
        $region76: #{tpu_custom_call.1} parent=23 // pred_fallthru
          _
        // Predicated region
        $region77: #{tpu_custom_call.1} parent=23 // pred_check
          %p670 = pneg %p447
        $region78: #{tpu_custom_call.1} parent=23 // pred_check_branch
          %672 = sbr.rel (%p670) target = $region80
        $region79: #{tpu_custom_call.1} parent=23 // pred_region
          %p673 = scmp.lt.s32.totalorder %s43, 1
          %s674 = scalar_select %p673, %s43, 1
          %s675 = scalar_lea.vmem %s15, %s674
        $region80: #{tpu_custom_call.1} parent=23 // pred_fallthru
          _
      $region24: #{tpu_custom_call.1} parent=5 // pred_fallthru
        _
      %p676 = scmp.le.s32.totalorder 1, %s35
      %p677 = scmp.lt.s32.totalorder %s35, 5
      %p678 = pnand %p676, %p677
      %p679 = pneg %p678
      // Predicated region
      $region81: #{tpu_custom_call.1} parent=5 // pred_check
        _
      $region82: #{tpu_custom_call.1} parent=5 // pred_check_branch
        %681 = sbr.rel (%p678) target = $region84
      $region83: #{tpu_custom_call.1} parent=5 // pred_region
        %s682 = ssub.s32 %s35, 1
        %s683 = sand.u32 %s60, 1
        %s684 = scalar_lea.sflag [#allocation3], %s683
        %s685 = sand.u32 %s60, 1
        %s686 = smul.addr %s685, 8
        %s687 = scalar_lea.vmem [#allocation2], %s686
        // Predicated region
        $region85: #{tpu_custom_call.1} parent=83 // pred_check
          %p688 = pneg %p73
        $region86: #{tpu_custom_call.1} parent=83 // pred_check_branch
          %690 = sbr.rel (%p688) target = $region88
        $region87: #{tpu_custom_call.1} parent=83 // pred_region
          %691 = dma.done %s684, 128
        $region88: #{tpu_custom_call.1} parent=83 // pred_fallthru
          _
        // Predicated region
        $region89: #{tpu_custom_call.1} parent=83 // pred_check
          %p692 = pneg %p120
        $region90: #{tpu_custom_call.1} parent=83 // pred_check_branch
          %694 = sbr.rel (%p692) target = $region92
        $region91: #{tpu_custom_call.1} parent=83 // pred_region
          %695 = dma.done [#allocation6], 16
        $region92: #{tpu_custom_call.1} parent=83 // pred_fallthru
          _
        // Predicated region
        $region93: #{tpu_custom_call.1} parent=83 // pred_check
          %p696 = pneg %p141
        $region94: #{tpu_custom_call.1} parent=83 // pred_check_branch
          %698 = sbr.rel (%p696) target = $region96
        $region95: #{tpu_custom_call.1} parent=83 // pred_region
          %699 = dma.done [#allocation6], 16
        $region96: #{tpu_custom_call.1} parent=83 // pred_fallthru
          _
        %s700 = sand.u32 %s40, 1
        %s701 = scalar_lea.sflag [#allocation9], %s700
        %s702 = sand.u32 %s154, 1
        %s703 = smul.addr %s702, 64
        %s704 = scalar_lea.vmem [#allocation8], %s703
        // Predicated region
        $region97: #{tpu_custom_call.1} parent=83 // pred_check
          %p705 = pneg %p167
        $region98: #{tpu_custom_call.1} parent=83 // pred_check_branch
          %707 = sbr.rel (%p705) target = $region100
        $region99: #{tpu_custom_call.1} parent=83 // pred_region
          %708 = dma.done %s701, 1024
        $region100: #{tpu_custom_call.1} parent=83 // pred_fallthru
          _
        %s709 = sand.u32 %s40, 1
        %s710 = scalar_lea.sflag [#allocation9], %s709
        %s711 = sand.u32 %s206, 1
        %s712 = smul.addr %s711, 16
        %s713 = scalar_lea.vmem [#allocation10], %s712
        // Predicated region
        $region101: #{tpu_custom_call.1} parent=83 // pred_check
          %p714 = pneg %p219
        $region102: #{tpu_custom_call.1} parent=83 // pred_check_branch
          %716 = sbr.rel (%p714) target = $region104
        $region103: #{tpu_custom_call.1} parent=83 // pred_region
          %717 = dma.done %s710, 256
        $region104: #{tpu_custom_call.1} parent=83 // pred_fallthru
          _
        %s718 = sand.u32 %s40, 1
        %s719 = scalar_lea.sflag [#allocation12], %s718
        %s720 = sand.u32 %s310, 1
        %s721 = smul.addr %s720, 64
        %s722 = scalar_lea.vmem [#allocation11], %s721
        // Predicated region
        $region105: #{tpu_custom_call.1} parent=83 // pred_check
          %p723 = pneg %p323
        $region106: #{tpu_custom_call.1} parent=83 // pred_check_branch
          %725 = sbr.rel (%p723) target = $region108
        $region107: #{tpu_custom_call.1} parent=83 // pred_region
          %726 = dma.done %s719, 1024
        $region108: #{tpu_custom_call.1} parent=83 // pred_fallthru
          _
        %s727 = sand.u32 %s40, 1
        %s728 = scalar_lea.sflag [#allocation12], %s727
        %s729 = sand.u32 %s362, 1
        %s730 = smul.addr %s729, 64
        %s731 = scalar_lea.vmem [#allocation13], %s730
        // Predicated region
        $region109: #{tpu_custom_call.1} parent=83 // pred_check
          %p732 = pneg %p375
        $region110: #{tpu_custom_call.1} parent=83 // pred_check_branch
          %734 = sbr.rel (%p732) target = $region112
        $region111: #{tpu_custom_call.1} parent=83 // pred_region
          %735 = dma.done %s728, 1024
        $region112: #{tpu_custom_call.1} parent=83 // pred_fallthru
          _
        %s736 = sand.u32 %s60, 1
        %s737 = scalar_lea.sflag [#allocation3], %s736
        %s738 = sand.u32 %s60, 1
        %s739 = smul.addr %s738, 8
        %s740 = scalar_lea.vmem [#allocation2], %s739
        %p741 = pneg %p73
        %p742 = pneg %p70
        %p743 = scmp.lt.s32.totalorder %s44, 1
        %s744 = scalar_select %p743, %s44, 1
        %s745 = scalar_lea.vmem %s1, %s744
        %p746 = pneg %p99
        %p747 = pneg %p96
        %p748 = pneg %p120
        %p749 = pneg %p117
        %p750 = pneg %p141
        %p751 = pneg %p138
        %s752 = sand.u32 %s40, 1
        %s753 = scalar_lea.sflag [#allocation9], %s752
        %s754 = sand.u32 %s154, 1
        %s755 = smul.addr %s754, 64
        %s756 = scalar_lea.vmem [#allocation8], %s755
        %p757 = pneg %p167
        %p758 = pneg %p164
        %p759 = scmp.lt.s32.totalorder %s45, 1
        %s760 = scalar_select %p759, %s45, 1
        %s761 = scalar_lea.vmem %s5, %s760
        %p762 = pneg %p193
        %p763 = pneg %p190
        %s764 = sand.u32 %s40, 1
        %s765 = scalar_lea.sflag [#allocation9], %s764
        %s766 = sand.u32 %s206, 1
        %s767 = smul.addr %s766, 16
        %s768 = scalar_lea.vmem [#allocation10], %s767
        %p769 = pneg %p219
        %p770 = pneg %p216
        %p771 = scmp.lt.s32.totalorder %s45, 1
        %s772 = scalar_select %p771, %s45, 1
        %s773 = scalar_lea.vmem %s7, %s772
        %p774 = pneg %p245
        %p775 = pneg %p242
        %p776 = scmp.lt.s32.totalorder %s45, 1
        %s777 = scalar_select %p776, %s45, 1
        %s778 = scalar_lea.vmem %s8, %s777
        %p779 = pneg %p271
        %p780 = pneg %p268
        %p781 = scmp.lt.s32.totalorder %s45, 1
        %s782 = scalar_select %p781, %s45, 1
        %s783 = scalar_lea.vmem %s9, %s782
        %p784 = pneg %p297
        %p785 = pneg %p294
        %s786 = sand.u32 %s40, 1
        %s787 = scalar_lea.sflag [#allocation12], %s786
        %s788 = sand.u32 %s310, 1
        %s789 = smul.addr %s788, 64
        %s790 = scalar_lea.vmem [#allocation11], %s789
        %p791 = pneg %p323
        %p792 = pneg %p320
        %p793 = scmp.lt.s32.totalorder %s45, 1
        %s794 = scalar_select %p793, %s45, 1
        %s795 = scalar_lea.vmem %s11, %s794
        %p796 = pneg %p349
        %p797 = pneg %p346
        %s798 = sand.u32 %s40, 1
        %s799 = scalar_lea.sflag [#allocation12], %s798
        %s800 = sand.u32 %s362, 1
        %s801 = smul.addr %s800, 64
        %s802 = scalar_lea.vmem [#allocation13], %s801
        %p803 = pneg %p375
        %p804 = pneg %p372
        %p805 = scmp.lt.s32.totalorder %s45, 1
        %s806 = scalar_select %p805, %s45, 1
        %s807 = scalar_lea.vmem %s13, %s806
        %p808 = pneg %p401
        %p809 = pneg %p398
        %p810 = scmp.lt.s32.totalorder %s45, 1
        %s811 = scalar_select %p810, %s45, 1
        %s812 = scalar_lea.vmem %s14, %s811
        %p813 = pneg %p427
        %p814 = pneg %p424
        %p815 = scmp.lt.s32.totalorder %s45, 1
        %s816 = scalar_select %p815, %s45, 1
        %s817 = scalar_lea.vmem %s15, %s816
        %p818 = pneg %p453
        %p819 = pneg %p450
        %p820 = pneg %p479
        %p821 = pneg %p476
        %s822 = sand.u32 %s466, 1
        %s823 = scalar_lea.sflag [#allocation4], %s822
        %s824 = sand.u32 %s466, 1
        %s825 = smul.addr %s824, 8
        %s826 = scalar_lea.vmem [#allocation14], %s825
        %p827 = scmp.lt.s32.totalorder %s44, 1
        %s828 = scalar_select %p827, %s44, 1
        %s829 = scalar_lea.vmem %s1, %s828
        %p830 = scmp.lt.s32.totalorder %s45, 1
        %s831 = scalar_select %p830, %s45, 1
        %s832 = scalar_lea.vmem %s5, %s831
        %p833 = scmp.lt.s32.totalorder %s45, 1
        %s834 = scalar_select %p833, %s45, 1
        %s835 = scalar_lea.vmem %s7, %s834
        %p836 = scmp.lt.s32.totalorder %s45, 1
        %s837 = scalar_select %p836, %s45, 1
        %s838 = scalar_lea.vmem %s8, %s837
        %p839 = scmp.lt.s32.totalorder %s45, 1
        %s840 = scalar_select %p839, %s45, 1
        %s841 = scalar_lea.vmem %s9, %s840
        %p842 = scmp.lt.s32.totalorder %s45, 1
        %s843 = scalar_select %p842, %s45, 1
        %s844 = scalar_lea.vmem %s11, %s843
        %p845 = scmp.lt.s32.totalorder %s45, 1
        %s846 = scalar_select %p845, %s45, 1
        %s847 = scalar_lea.vmem %s13, %s846
        %p848 = scmp.lt.s32.totalorder %s45, 1
        %s849 = scalar_select %p848, %s45, 1
        %s850 = scalar_lea.vmem %s14, %s849
        %p851 = scmp.lt.s32.totalorder %s45, 1
        %s852 = scalar_select %p851, %s45, 1
        %s853 = scalar_lea.vmem %s15, %s852
        %p855 = scmp.eq.s32.totalorder %s45, 0
        // Predicated region
        $region113: #{tpu_custom_call.1} parent=83 // pred_check
          %p856 = pneg %p855
        $region114: #{tpu_custom_call.1} parent=83 // pred_check_branch
          %858 = sbr.rel (%p856) target = $region116
        $region115: #{tpu_custom_call.1} parent=83 // pred_region
          %v859 = vld [vmem:[%s687] sm:$0xff]
          %v860 = vld [vmem:[#allocation5] sm:$0x1]
          %v861 = vld [vmem:[#allocation7] sm:$0x1]
          %862 = vadd.xlane.f32.xlu0 %v859
          %v863 = vpop.xlane.xlu0 %862
          %v864 = vmul.f32 %v863, 0.03125
          %v865 = vmul.f32 %v859, %v859
          %866 = vadd.xlane.f32.xlu0 %v865
          %v867 = vpop.xlane.xlu0 %866
          %v868 = vmul.f32 %v867, 0.03125
          %v869 = vmul.f32 %v864, %v864
          %v870 = vsub.f32 %v868, %v869
          %v871 = vmax.f32 %v870, 0.0
          %v872 = vsub.f32 %v859, %v864
          %v873 = vadd.f32 %v871, 1e-12
          %v874 = vrsqrt.pop %v873
          %v875 = vmul.f32 %v872, %v874
          %v877 = vlaneseq
          %v878 = vshrl.u32 %v877, 7
          %v879 = vsub.s32 0, %v878
          %v880 = vrot.slane %v860, %v879
          %v882 = vmul.f32 %v875, %v880
          %v884 = vlaneseq
          %v885 = vshrl.u32 %v884, 7
          %v886 = vsub.s32 0, %v885
          %v887 = vrot.slane %v861, %v886
          %v889 = vadd.f32 %v882, %v887
          %890 = vst [vmem:[%s826] sm:$0xff] %v889
        $region116: #{tpu_custom_call.1} parent=83 // pred_fallthru
          _
        %v891 = vld [vmem:[%s826] sm:$0xff]
        %v892 = vpack.c.bf16 %v891, %v891
        %v893 = vld [vmem:[%s829] sm:$0x1]
        %v894 = vld [vmem:[%s704] sm:$0xf]
        %v895 = vld [vmem:[%s704 + $0x4] sm:$0xf]
        %v896 = vld [vmem:[%s704 + $0x8] sm:$0xf]
        %v897 = vld [vmem:[%s704 + $0xc] sm:$0xf]
        %v898 = vld [vmem:[%s704 + $0x10] sm:$0xf]
        %v899 = vld [vmem:[%s704 + $0x14] sm:$0xf]
        %v900 = vld [vmem:[%s704 + $0x18] sm:$0xf]
        %v901 = vld [vmem:[%s704 + $0x1c] sm:$0xf]
        %v902 = vld [vmem:[%s704 + $0x20] sm:$0xf]
        %v903 = vld [vmem:[%s704 + $0x24] sm:$0xf]
        %v904 = vld [vmem:[%s704 + $0x28] sm:$0xf]
        %v905 = vld [vmem:[%s704 + $0x2c] sm:$0xf]
        %v906 = vld [vmem:[%s704 + $0x30] sm:$0xf]
        %v907 = vld [vmem:[%s704 + $0x34] sm:$0xf]
        %v908 = vld [vmem:[%s704 + $0x38] sm:$0xf]
        %v909 = vld [vmem:[%s704 + $0x3c] sm:$0xf]
        %v910 = vld [vmem:[%s832] sm:$0x1]
        %v912 = vlaneseq
        %v913 = vshrl.u32 %v912, 7
        %v914 = vsub.s32 0, %v913
        %v915 = vrot.slane %v910, %v914
        %v933 = vunpack.c.l.b16 %v894
        %v934 = vunpack.c.l.b16 %v895
        %v935 = vunpack.c.l.b16 %v896
        %v936 = vunpack.c.l.b16 %v897
        %v937 = vunpack.c.l.b16 %v898
        %v938 = vunpack.c.l.b16 %v899
        %v939 = vunpack.c.l.b16 %v900
        %v940 = vunpack.c.l.b16 %v901
        %v941 = vunpack.c.l.b16 %v902
        %v942 = vunpack.c.l.b16 %v903
        %v943 = vunpack.c.l.b16 %v904
        %v944 = vunpack.c.l.b16 %v905
        %v945 = vunpack.c.l.b16 %v906
        %v946 = vunpack.c.l.b16 %v907
        %v947 = vunpack.c.l.b16 %v908
        %v948 = vunpack.c.l.b16 %v909
        %v949 = vpack.c.b16 %v934, %v933
        %v950 = vpack.c.b16 %v936, %v935
        %v951 = vpack.c.b16 %v938, %v937
        %v952 = vpack.c.b16 %v940, %v939
        %v953 = vpack.c.b16 %v942, %v941
        %v954 = vpack.c.b16 %v944, %v943
        %v955 = vpack.c.b16 %v946, %v945
        %v956 = vpack.c.b16 %v948, %v947
        %965 = vmatprep.subr.bf16.mxu0 0
        %966 = vmatpush1.bf16.msra.mxu0 %v949
        %967 = vmatprep.subr.bf16.mxu0 0
        %968 = vmatpush1.bf16.msra.mxu0 %v950
        %969 = vmatprep.subr.bf16.mxu0 0
        %970 = vmatpush1.bf16.msra.mxu0 %v951
        %971 = vmatprep.subr.bf16.mxu0 0
        %972 = vmatpush1.bf16.msra.mxu0 %v952
        %973 = vmatprep.subr.bf16.mxu0 0
        %974 = vmatpush1.bf16.msra.mxu0 %v953
        %975 = vmatprep.subr.bf16.mxu0 0
        %976 = vmatpush1.bf16.msra.mxu0 %v954
        %977 = vmatprep.subr.bf16.mxu0 0
        %978 = vmatpush1.bf16.msra.mxu0 %v955
        %979 = vmatprep.subr.bf16.mxu0 0
        %980 = vmatpush1.bf16.msra.mxu0 %v956
        %981 = vmatprep.subr.bf16.mxu0 0
        %982 = vmatpush1.bf16.msra.mxu0 0
        %983 = vmatprep.subr.bf16.mxu0 0
        %984 = vmatpush1.bf16.msra.mxu0 0
        %985 = vmatprep.subr.bf16.mxu0 0
        %986 = vmatpush1.bf16.msra.mxu0 0
        %987 = vmatprep.subr.bf16.mxu0 0
        %988 = vmatpush1.bf16.msra.mxu0 0
        %989 = vmatprep.subr.bf16.mxu0 0
        %990 = vmatpush1.bf16.msra.mxu0 0
        %991 = vmatprep.subr.bf16.mxu0 0
        %992 = vmatpush1.bf16.msra.mxu0 0
        %993 = vmatprep.subr.bf16.mxu0 0
        %994 = vmatpush1.bf16.msra.mxu0 0
        %995 = vmatprep.subr.bf16.mxu0 0
        %996 = vmatpush1.bf16.msra.mxu0 0
        %997 = vmatprep.mubr.bf16.mxu0 0
        %998 = vmatmul.mubr.bf16.gmra.mrb[0].mxu0 %v892
        %v999 = vpop.f32.mrb[0].mxu0
        %v1000 = vadd.f32 %v915, %v999
        %v1001 = vpop.f32.mrb[0].mxu0
        %v1002 = vpop.f32.mrb[0].mxu0
        %v1003 = vpop.f32.mrb[0].mxu0
        %1004 = vdwg.mxu0
        %v1005 = vpack.c.bf16 %v1000, %v1000
        %v1007 = vlaneseq
        %v1008 = vshrl.u32 %v1007, 7
        %v1009 = vsub.s32 0, %v1008
        %v1010 = vrot.slane %v893, %v1009
        %1013 = vrot.lane.b32.xlu0 %v1005, 96
        %v1014 = vpop.permute.xlu0 %1013
        %vm1015 = vcmask 64512
        %v1017 = vsel %vm1015, %v1005, 0
        %v1020 = vsel %vm1015, %v1014, 0
        %1022 = vmatprep.subr.bf16.mxu0 0
        %1023 = vmatpush1.bf16.xpose.msra.mxu0 %v1020
        %1024 = vmatprep.subr.bf16.mxu0 0
        %1025 = vmatpush1.bf16.xpose.msra.mxu0 0
        %1026 = vmatprep.subr.bf16.mxu0 0
        %1027 = vmatpush1.bf16.xpose.msra.mxu0 0
        %1028 = vmatprep.subr.bf16.mxu0 0
        %1029 = vmatpush1.bf16.xpose.msra.mxu0 0
        %1030 = vmatprep.subr.bf16.mxu0 0
        %1031 = vmatpush1.bf16.xpose.msra.mxu0 0
        %1032 = vmatprep.subr.bf16.mxu0 0
        %1033 = vmatpush1.bf16.xpose.msra.mxu0 0
        %1034 = vmatprep.subr.bf16.mxu0 0
        %1035 = vmatpush1.bf16.xpose.msra.mxu0 0
        %1036 = vmatprep.subr.bf16.mxu0 0
        %1037 = vmatpush1.bf16.xpose.msra.mxu0 0
        %1038 = vmatprep.subr.bf16.mxu0 0
        %1039 = vmatpush1.bf16.xpose.msra.mxu0 0
        %1040 = vmatprep.subr.bf16.mxu0 0
        %1041 = vmatpush1.bf16.xpose.msra.mxu0 0
        %1042 = vmatprep.subr.bf16.mxu0 0
        %1043 = vmatpush1.bf16.xpose.msra.mxu0 0
        %1044 = vmatprep.subr.bf16.mxu0 0
        %1045 = vmatpush1.bf16.xpose.msra.mxu0 0
        %1046 = vmatprep.subr.bf16.mxu0 0
        %1047 = vmatpush1.bf16.xpose.msra.mxu0 0
        %1048 = vmatprep.subr.bf16.mxu0 0
        %1049 = vmatpush1.bf16.xpose.msra.mxu0 0
        %1050 = vmatprep.subr.bf16.mxu0 0
        %1051 = vmatpush1.bf16.xpose.msra.mxu0 0
        %1052 = vmatprep.subr.bf16.mxu0 0
        %1053 = vmatpush1.bf16.xpose.msra.mxu0 0
        %1054 = vmatprep.mubr.bf16.mxu0 0
        %1055 = vmatmul.mubr.bf16.gmra.mrb[0].mxu0 %v1017
        %v1056 = vpop.f32.mrb[0].mxu0
        %v1057 = vadd.f32 %v1010, %v1056
        %v1058 = vpop.f32.mrb[0].mxu0
        %v1059 = vpop.f32.mrb[0].mxu0
        %v1060 = vpop.f32.mrb[0].mxu0
        %1061 = vdwg.mxu0
        %v1062 = vsel %vm1015, %v1057, -inf
        %1063 = vmax.xlane.f32.xlu0 %v1062
        %v1064 = vpop.xlane.xlu0 %1063
        %v1065 = vsub.f32 %v1057, %v1064
        %v1066 = vmul.f32 %v1065, 1.442695
        %v1067 = vpow.pop %v1066
        %v1068 = vsel %vm1015, %v1067, 0.0
        %1069 = vadd.xlane.f32.xlu0 %v1068
        %v1070 = vpop.xlane.xlu0 %1069
        %v1071 = vrcp.pop %v1070
        %v1072 = vmul.f32 %v1067, %v1071
        %v1073 = vpack.c.bf16 %v1072, %v1072
        %1074 = vrot.lane.b32.xlu0 %v1005, 64
        %v1075 = vpop.permute.xlu0 %1074
        %v1077 = vsel %vm1015, %v1073, 0
        %vm1079 = vcmask 1043456
        %v1081 = vsel %vm1079, %v1075, 0
        %1083 = vmatprep.subr.bf16.mxu0 0
        %1084 = vmatpush1.bf16.msra.mxu0 %v1081
        %1085 = vmatprep.subr.bf16.mxu0 0
        %1086 = vmatpush1.bf16.msra.mxu0 0
        %1087 = vmatprep.subr.bf16.mxu0 0
        %1088 = vmatpush1.bf16.msra.mxu0 0
        %1089 = vmatprep.subr.bf16.mxu0 0
        %1090 = vmatpush1.bf16.msra.mxu0 0
        %1091 = vmatprep.subr.bf16.mxu0 0
        %1092 = vmatpush1.bf16.msra.mxu0 0
        %1093 = vmatprep.subr.bf16.mxu0 0
        %1094 = vmatpush1.bf16.msra.mxu0 0
        %1095 = vmatprep.subr.bf16.mxu0 0
        %1096 = vmatpush1.bf16.msra.mxu0 0
        %1097 = vmatprep.subr.bf16.mxu0 0
        %1098 = vmatpush1.bf16.msra.mxu0 0
        %1099 = vmatprep.subr.bf16.mxu0 0
        %1100 = vmatpush1.bf16.msra.mxu0 0
        %1101 = vmatprep.subr.bf16.mxu0 0
        %1102 = vmatpush1.bf16.msra.mxu0 0
        %1103 = vmatprep.subr.bf16.mxu0 0
        %1104 = vmatpush1.bf16.msra.mxu0 0
        %1105 = vmatprep.subr.bf16.mxu0 0
        %1106 = vmatpush1.bf16.msra.mxu0 0
        %1107 = vmatprep.subr.bf16.mxu0 0
        %1108 = vmatpush1.bf16.msra.mxu0 0
        %1109 = vmatprep.subr.bf16.mxu0 0
        %1110 = vmatpush1.bf16.msra.mxu0 0
        %1111 = vmatprep.subr.bf16.mxu0 0
        %1112 = vmatpush1.bf16.msra.mxu0 0
        %1113 = vmatprep.subr.bf16.mxu0 0
        %1114 = vmatpush1.bf16.msra.mxu0 0
        %1115 = vmatprep.mubr.bf16.mxu0 0
        %1116 = vmatmul.mubr.bf16.gmra.mrb[0].mxu0 %v1077
        %v1117 = vpop.f32.mrb[0].mxu0
        %v1118 = vadd.f32 0.0, %v1117
        %v1119 = vpop.f32.mrb[0].mxu0
        %v1120 = vpop.f32.mrb[0].mxu0
        %v1121 = vpop.f32.mrb[0].mxu0
        %1122 = vdwg.mxu0
        %1123 = vrot.lane.b32.xlu0 %v1005, 120
        %v1124 = vpop.permute.xlu0 %1123
        %1125 = vrot.lane.b32.xlu0 %v1005, 88
        %v1126 = vpop.permute.xlu0 %1125
        %v1128 = vsel %vm1015, %v1124, 0
        %v1131 = vsel %vm1015, %v1126, 0
        %1133 = vmatprep.subr.bf16.mxu0 0
        %1134 = vmatpush1.bf16.xpose.msra.mxu0 %v1131
        %1135 = vmatprep.subr.bf16.mxu0 0
        %1136 = vmatpush1.bf16.xpose.msra.mxu0 0
        %1137 = vmatprep.subr.bf16.mxu0 0
        %1138 = vmatpush1.bf16.xpose.msra.mxu0 0
        %1139 = vmatprep.subr.bf16.mxu0 0
        %1140 = vmatpush1.bf16.xpose.msra.mxu0 0
        %1141 = vmatprep.subr.bf16.mxu0 0
        %1142 = vmatpush1.bf16.xpose.msra.mxu0 0
        %1143 = vmatprep.subr.bf16.mxu0 0
        %1144 = vmatpush1.bf16.xpose.msra.mxu0 0
        %1145 = vmatprep.subr.bf16.mxu0 0
        %1146 = vmatpush1.bf16.xpose.msra.mxu0 0
        %1147 = vmatprep.subr.bf16.mxu0 0
        %1148 = vmatpush1.bf16.xpose.msra.mxu0 0
        %1149 = vmatprep.subr.bf16.mxu0 0
        %1150 = vmatpush1.bf16.xpose.msra.mxu0 0
        %1151 = vmatprep.subr.bf16.mxu0 0
        %1152 = vmatpush1.bf16.xpose.msra.mxu0 0
        %1153 = vmatprep.subr.bf16.mxu0 0
        %1154 = vmatpush1.bf16.xpose.msra.mxu0 0
        %1155 = vmatprep.subr.bf16.mxu0 0
        %1156 = vmatpush1.bf16.xpose.msra.mxu0 0
        %1157 = vmatprep.subr.bf16.mxu0 0
        %1158 = vmatpush1.bf16.xpose.msra.mxu0 0
        %1159 = vmatprep.subr.bf16.mxu0 0
        %1160 = vmatpush1.bf16.xpose.msra.mxu0 0
        %1161 = vmatprep.subr.bf16.mxu0 0
        %1162 = vmatpush1.bf16.xpose.msra.mxu0 0
        %1163 = vmatprep.subr.bf16.mxu0 0
        %1164 = vmatpush1.bf16.xpose.msra.mxu0 0
        %1165 = vmatprep.mubr.bf16.mxu0 0
        %1166 = vmatmul.mubr.bf16.gmra.mrb[0].mxu0 %v1128
        %v1167 = vpop.f32.mrb[0].mxu0
        %v1168 = vadd.f32 %v1010, %v1167
        %v1169 = vpop.f32.mrb[0].mxu0
        %v1170 = vpop.f32.mrb[0].mxu0
        %v1171 = vpop.f32.mrb[0].mxu0
        %1172 = vdwg.mxu0
        %v1173 = vsel %vm1015, %v1168, -inf
        %1174 = vmax.xlane.f32.xlu0 %v1173
        %v1175 = vpop.xlane.xlu0 %1174
        %v1176 = vsub.f32 %v1168, %v1175
        %v1177 = vmul.f32 %v1176, 1.442695
        %v1178 = vpow.pop %v1177
        %v1179 = vsel %vm1015, %v1178, 0.0
        %1180 = vadd.xlane.f32.xlu0 %v1179
        %v1181 = vpop.xlane.xlu0 %1180
        %v1182 = vrcp.pop %v1181
        %v1183 = vmul.f32 %v1178, %v1182
        %v1184 = vpack.c.bf16 %v1183, %v1183
        %1185 = vrot.lane.b32.xlu0 %v1005, 56
        %v1186 = vpop.permute.xlu0 %1185
        %v1188 = vsel %vm1015, %v1184, 0
        %v1191 = vsel %vm1079, %v1186, 0
        %1193 = vmatprep.subr.bf16.mxu0 0
        %1194 = vmatpush1.bf16.msra.mxu0 %v1191
        %1195 = vmatprep.subr.bf16.mxu0 0
        %1196 = vmatpush1.bf16.msra.mxu0 0
        %1197 = vmatprep.subr.bf16.mxu0 0
        %1198 = vmatpush1.bf16.msra.mxu0 0
        %1199 = vmatprep.subr.bf16.mxu0 0
        %1200 = vmatpush1.bf16.msra.mxu0 0
        %1201 = vmatprep.subr.bf16.mxu0 0
        %1202 = vmatpush1.bf16.msra.mxu0 0
        %1203 = vmatprep.subr.bf16.mxu0 0
        %1204 = vmatpush1.bf16.msra.mxu0 0
        %1205 = vmatprep.subr.bf16.mxu0 0
        %1206 = vmatpush1.bf16.msra.mxu0 0
        %1207 = vmatprep.subr.bf16.mxu0 0
        %1208 = vmatpush1.bf16.msra.mxu0 0
        %1209 = vmatprep.subr.bf16.mxu0 0
        %1210 = vmatpush1.bf16.msra.mxu0 0
        %1211 = vmatprep.subr.bf16.mxu0 0
        %1212 = vmatpush1.bf16.msra.mxu0 0
        %1213 = vmatprep.subr.bf16.mxu0 0
        %1214 = vmatpush1.bf16.msra.mxu0 0
        %1215 = vmatprep.subr.bf16.mxu0 0
        %1216 = vmatpush1.bf16.msra.mxu0 0
        %1217 = vmatprep.subr.bf16.mxu0 0
        %1218 = vmatpush1.bf16.msra.mxu0 0
        %1219 = vmatprep.subr.bf16.mxu0 0
        %1220 = vmatpush1.bf16.msra.mxu0 0
        %1221 = vmatprep.subr.bf16.mxu0 0
        %1222 = vmatpush1.bf16.msra.mxu0 0
        %1223 = vmatprep.subr.bf16.mxu0 0
        %1224 = vmatpush1.bf16.msra.mxu0 0
        %1225 = vmatprep.mubr.bf16.mxu0 0
        %1226 = vmatmul.mubr.bf16.gmra.mrb[0].mxu0 %v1188
        %v1227 = vpop.f32.mrb[0].mxu0
        %v1228 = vadd.f32 0.0, %v1227
        %v1229 = vpop.f32.mrb[0].mxu0
        %v1230 = vpop.f32.mrb[0].mxu0
        %v1231 = vpop.f32.mrb[0].mxu0
        %1232 = vdwg.mxu0
        %1233 = vrot.lane.b32.xlu0 %v1005, 112
        %v1234 = vpop.permute.xlu0 %1233
        %1235 = vrot.lane.b32.xlu0 %v1005, 80
        %v1236 = vpop.permute.xlu0 %1235
        %v1238 = vsel %vm1015, %v1234, 0
        %v1241 = vsel %vm1015, %v1236, 0
        %1243 = vmatprep.subr.bf16.mxu0 0
        %1244 = vmatpush1.bf16.xpose.msra.mxu0 %v1241
        %1245 = vmatprep.subr.bf16.mxu0 0
        %1246 = vmatpush1.bf16.xpose.msra.mxu0 0
        %1247 = vmatprep.subr.bf16.mxu0 0
        %1248 = vmatpush1.bf16.xpose.msra.mxu0 0
        %1249 = vmatprep.subr.bf16.mxu0 0
        %1250 = vmatpush1.bf16.xpose.msra.mxu0 0
        %1251 = vmatprep.subr.bf16.mxu0 0
        %1252 = vmatpush1.bf16.xpose.msra.mxu0 0
        %1253 = vmatprep.subr.bf16.mxu0 0
        %1254 = vmatpush1.bf16.xpose.msra.mxu0 0
        %1255 = vmatprep.subr.bf16.mxu0 0
        %1256 = vmatpush1.bf16.xpose.msra.mxu0 0
        %1257 = vmatprep.subr.bf16.mxu0 0
        %1258 = vmatpush1.bf16.xpose.msra.mxu0 0
        %1259 = vmatprep.subr.bf16.mxu0 0
        %1260 = vmatpush1.bf16.xpose.msra.mxu0 0
        %1261 = vmatprep.subr.bf16.mxu0 0
        %1262 = vmatpush1.bf16.xpose.msra.mxu0 0
        %1263 = vmatprep.subr.bf16.mxu0 0
        %1264 = vmatpush1.bf16.xpose.msra.mxu0 0
        %1265 = vmatprep.subr.bf16.mxu0 0
        %1266 = vmatpush1.bf16.xpose.msra.mxu0 0
        %1267 = vmatprep.subr.bf16.mxu0 0
        %1268 = vmatpush1.bf16.xpose.msra.mxu0 0
        %1269 = vmatprep.subr.bf16.mxu0 0
        %1270 = vmatpush1.bf16.xpose.msra.mxu0 0
        %1271 = vmatprep.subr.bf16.mxu0 0
        %1272 = vmatpush1.bf16.xpose.msra.mxu0 0
        %1273 = vmatprep.subr.bf16.mxu0 0
        %1274 = vmatpush1.bf16.xpose.msra.mxu0 0
        %1275 = vmatprep.mubr.bf16.mxu0 0
        %1276 = vmatmul.mubr.bf16.gmra.mrb[0].mxu0 %v1238
        %v1277 = vpop.f32.mrb[0].mxu0
        %v1278 = vadd.f32 %v1010, %v1277
        %v1279 = vpop.f32.mrb[0].mxu0
        %v1280 = vpop.f32.mrb[0].mxu0
        %v1281 = vpop.f32.mrb[0].mxu0
        %1282 = vdwg.mxu0
        %v1283 = vsel %vm1015, %v1278, -inf
        %1284 = vmax.xlane.f32.xlu0 %v1283
        %v1285 = vpop.xlane.xlu0 %1284
        %v1286 = vsub.f32 %v1278, %v1285
        %v1287 = vmul.f32 %v1286, 1.442695
        %v1288 = vpow.pop %v1287
        %v1289 = vsel %vm1015, %v1288, 0.0
        %1290 = vadd.xlane.f32.xlu0 %v1289
        %v1291 = vpop.xlane.xlu0 %1290
        %v1292 = vrcp.pop %v1291
        %v1293 = vmul.f32 %v1288, %v1292
        %v1294 = vpack.c.bf16 %v1293, %v1293
        %1295 = vrot.lane.b32.xlu0 %v1005, 48
        %v1296 = vpop.permute.xlu0 %1295
        %v1298 = vsel %vm1015, %v1294, 0
        %v1301 = vsel %vm1079, %v1296, 0
        %1303 = vmatprep.subr.bf16.mxu0 0
        %1304 = vmatpush1.bf16.msra.mxu0 %v1301
        %1305 = vmatprep.subr.bf16.mxu0 0
        %1306 = vmatpush1.bf16.msra.mxu0 0
        %1307 = vmatprep.subr.bf16.mxu0 0
        %1308 = vmatpush1.bf16.msra.mxu0 0
        %1309 = vmatprep.subr.bf16.mxu0 0
        %1310 = vmatpush1.bf16.msra.mxu0 0
        %1311 = vmatprep.subr.bf16.mxu0 0
        %1312 = vmatpush1.bf16.msra.mxu0 0
        %1313 = vmatprep.subr.bf16.mxu0 0
        %1314 = vmatpush1.bf16.msra.mxu0 0
        %1315 = vmatprep.subr.bf16.mxu0 0
        %1316 = vmatpush1.bf16.msra.mxu0 0
        %1317 = vmatprep.subr.bf16.mxu0 0
        %1318 = vmatpush1.bf16.msra.mxu0 0
        %1319 = vmatprep.subr.bf16.mxu0 0
        %1320 = vmatpush1.bf16.msra.mxu0 0
        %1321 = vmatprep.subr.bf16.mxu0 0
        %1322 = vmatpush1.bf16.msra.mxu0 0
        %1323 = vmatprep.subr.bf16.mxu0 0
        %1324 = vmatpush1.bf16.msra.mxu0 0
        %1325 = vmatprep.subr.bf16.mxu0 0
        %1326 = vmatpush1.bf16.msra.mxu0 0
        %1327 = vmatprep.subr.bf16.mxu0 0
        %1328 = vmatpush1.bf16.msra.mxu0 0
        %1329 = vmatprep.subr.bf16.mxu0 0
        %1330 = vmatpush1.bf16.msra.mxu0 0
        %1331 = vmatprep.subr.bf16.mxu0 0
        %1332 = vmatpush1.bf16.msra.mxu0 0
        %1333 = vmatprep.subr.bf16.mxu0 0
        %1334 = vmatpush1.bf16.msra.mxu0 0
        %1335 = vmatprep.mubr.bf16.mxu0 0
        %1336 = vmatmul.mubr.bf16.gmra.mrb[0].mxu0 %v1298
        %v1337 = vpop.f32.mrb[0].mxu0
        %v1338 = vadd.f32 0.0, %v1337
        %v1339 = vpop.f32.mrb[0].mxu0
        %v1340 = vpop.f32.mrb[0].mxu0
        %v1341 = vpop.f32.mrb[0].mxu0
        %1342 = vdwg.mxu0
        %1343 = vrot.lane.b32.xlu0 %v1005, 104
        %v1344 = vpop.permute.xlu0 %1343
        %1345 = vrot.lane.b32.xlu0 %v1005, 72
        %v1346 = vpop.permute.xlu0 %1345
        %v1348 = vsel %vm1015, %v1344, 0
        %v1351 = vsel %vm1015, %v1346, 0
        %1353 = vmatprep.subr.bf16.mxu0 0
        %1354 = vmatpush1.bf16.xpose.msra.mxu0 %v1351
        %1355 = vmatprep.subr.bf16.mxu0 0
        %1356 = vmatpush1.bf16.xpose.msra.mxu0 0
        %1357 = vmatprep.subr.bf16.mxu0 0
        %1358 = vmatpush1.bf16.xpose.msra.mxu0 0
        %1359 = vmatprep.subr.bf16.mxu0 0
        %1360 = vmatpush1.bf16.xpose.msra.mxu0 0
        %1361 = vmatprep.subr.bf16.mxu0 0
        %1362 = vmatpush1.bf16.xpose.msra.mxu0 0
        %1363 = vmatprep.subr.bf16.mxu0 0
        %1364 = vmatpush1.bf16.xpose.msra.mxu0 0
        %1365 = vmatprep.subr.bf16.mxu0 0
        %1366 = vmatpush1.bf16.xpose.msra.mxu0 0
        %1367 = vmatprep.subr.bf16.mxu0 0
        %1368 = vmatpush1.bf16.xpose.msra.mxu0 0
        %1369 = vmatprep.subr.bf16.mxu0 0
        %1370 = vmatpush1.bf16.xpose.msra.mxu0 0
        %1371 = vmatprep.subr.bf16.mxu0 0
        %1372 = vmatpush1.bf16.xpose.msra.mxu0 0
        %1373 = vmatprep.subr.bf16.mxu0 0
        %1374 = vmatpush1.bf16.xpose.msra.mxu0 0
        %1375 = vmatprep.subr.bf16.mxu0 0
        %1376 = vmatpush1.bf16.xpose.msra.mxu0 0
        %1377 = vmatprep.subr.bf16.mxu0 0
        %1378 = vmatpush1.bf16.xpose.msra.mxu0 0
        %1379 = vmatprep.subr.bf16.mxu0 0
        %1380 = vmatpush1.bf16.xpose.msra.mxu0 0
        %1381 = vmatprep.subr.bf16.mxu0 0
        %1382 = vmatpush1.bf16.xpose.msra.mxu0 0
        %1383 = vmatprep.subr.bf16.mxu0 0
        %1384 = vmatpush1.bf16.xpose.msra.mxu0 0
        %1385 = vmatprep.mubr.bf16.mxu0 0
        %1386 = vmatmul.mubr.bf16.gmra.mrb[0].mxu0 %v1348
        %v1387 = vpop.f32.mrb[0].mxu0
        %v1388 = vadd.f32 %v1010, %v1387
        %v1389 = vpop.f32.mrb[0].mxu0
        %v1390 = vpop.f32.mrb[0].mxu0
        %v1391 = vpop.f32.mrb[0].mxu0
        %1392 = vdwg.mxu0
        %v1393 = vsel %vm1015, %v1388, -inf
        %1394 = vmax.xlane.f32.xlu0 %v1393
        %v1395 = vpop.xlane.xlu0 %1394
        %v1396 = vsub.f32 %v1388, %v1395
        %v1397 = vmul.f32 %v1396, 1.442695
        %v1398 = vpow.pop %v1397
        %v1399 = vsel %vm1015, %v1398, 0.0
        %1400 = vadd.xlane.f32.xlu0 %v1399
        %v1401 = vpop.xlane.xlu0 %1400
        %v1402 = vrcp.pop %v1401
        %v1403 = vmul.f32 %v1398, %v1402
        %v1404 = vpack.c.bf16 %v1403, %v1403
        %1405 = vrot.lane.b32.xlu0 %v1005, 40
        %v1406 = vpop.permute.xlu0 %1405
        %v1408 = vsel %vm1015, %v1404, 0
        %v1411 = vsel %vm1079, %v1406, 0
        %1413 = vmatprep.subr.bf16.mxu0 0
        %1414 = vmatpush1.bf16.msra.mxu0 %v1411
        %1415 = vmatprep.subr.bf16.mxu0 0
        %1416 = vmatpush1.bf16.msra.mxu0 0
        %1417 = vmatprep.subr.bf16.mxu0 0
        %1418 = vmatpush1.bf16.msra.mxu0 0
        %1419 = vmatprep.subr.bf16.mxu0 0
        %1420 = vmatpush1.bf16.msra.mxu0 0
        %1421 = vmatprep.subr.bf16.mxu0 0
        %1422 = vmatpush1.bf16.msra.mxu0 0
        %1423 = vmatprep.subr.bf16.mxu0 0
        %1424 = vmatpush1.bf16.msra.mxu0 0
        %1425 = vmatprep.subr.bf16.mxu0 0
        %1426 = vmatpush1.bf16.msra.mxu0 0
        %1427 = vmatprep.subr.bf16.mxu0 0
        %1428 = vmatpush1.bf16.msra.mxu0 0
        %1429 = vmatprep.subr.bf16.mxu0 0
        %1430 = vmatpush1.bf16.msra.mxu0 0
        %1431 = vmatprep.subr.bf16.mxu0 0
        %1432 = vmatpush1.bf16.msra.mxu0 0
        %1433 = vmatprep.subr.bf16.mxu0 0
        %1434 = vmatpush1.bf16.msra.mxu0 0
        %1435 = vmatprep.subr.bf16.mxu0 0
        %1436 = vmatpush1.bf16.msra.mxu0 0
        %1437 = vmatprep.subr.bf16.mxu0 0
        %1438 = vmatpush1.bf16.msra.mxu0 0
        %1439 = vmatprep.subr.bf16.mxu0 0
        %1440 = vmatpush1.bf16.msra.mxu0 0
        %1441 = vmatprep.subr.bf16.mxu0 0
        %1442 = vmatpush1.bf16.msra.mxu0 0
        %1443 = vmatprep.subr.bf16.mxu0 0
        %1444 = vmatpush1.bf16.msra.mxu0 0
        %1445 = vmatprep.mubr.bf16.mxu0 0
        %1446 = vmatmul.mubr.bf16.gmra.mrb[0].mxu0 %v1408
        %v1447 = vpop.f32.mrb[0].mxu0
        %v1448 = vadd.f32 0.0, %v1447
        %v1449 = vpop.f32.mrb[0].mxu0
        %v1450 = vpop.f32.mrb[0].mxu0
        %v1451 = vpop.f32.mrb[0].mxu0
        %1452 = vdwg.mxu0
        %1454 = vrot.lane.b32.xlu0 %v1228, 8
        %v1455 = vpop.permute.xlu0 %1454
        %1458 = vrot.lane.b32.xlu0 %v1338, 16
        %v1459 = vpop.permute.xlu0 %1458
        %1462 = vrot.lane.b32.xlu0 %v1448, 24
        %v1463 = vpop.permute.xlu0 %1462
        %v1465 = vsel %vm1015, %v1118, %v1455
        %vm1466 = vcmask 130048
        %v1467 = vsel %vm1466, %v1465, %v1459
        %vm1468 = vcmask 195584
        %v1469 = vsel %vm1468, %v1467, %v1463
        %v1470 = vpack.c.bf16 %v1469, %v1469
        %v1471 = vld [vmem:[%s713] sm:$0xf]
        %v1472 = vld [vmem:[%s713 + $0x4] sm:$0xf]
        %v1473 = vld [vmem:[%s713 + $0x8] sm:$0xf]
        %v1474 = vld [vmem:[%s713 + $0xc] sm:$0xf]
        %v1475 = vld [vmem:[%s835] sm:$0x1]
        %v1477 = vlaneseq
        %v1478 = vshrl.u32 %v1477, 7
        %v1479 = vsub.s32 0, %v1478
        %v1480 = vrot.slane %v1475, %v1479
        %v1486 = vunpack.c.l.b16 %v1471
        %v1487 = vunpack.c.l.b16 %v1472
        %v1488 = vunpack.c.l.b16 %v1473
        %v1489 = vunpack.c.l.b16 %v1474
        %v1490 = vpack.c.b16 %v1487, %v1486
        %v1491 = vpack.c.b16 %v1489, %v1488
        %vm1494 = vcmask 261120
        %v1496 = vsel %vm1494, %v1470, 0
        %1498 = vmatprep.subr.bf16.mxu0 0
        %1499 = vmatpush1.bf16.msra.mxu0 %v1490
        %1500 = vmatprep.subr.bf16.mxu0 0
        %1501 = vmatpush1.bf16.msra.mxu0 %v1491
        %1502 = vmatprep.subr.bf16.mxu0 0
        %1503 = vmatpush1.bf16.msra.mxu0 0
        %1504 = vmatprep.subr.bf16.mxu0 0
        %1505 = vmatpush1.bf16.msra.mxu0 0
        %1506 = vmatprep.subr.bf16.mxu0 0
        %1507 = vmatpush1.bf16.msra.mxu0 0
        %1508 = vmatprep.subr.bf16.mxu0 0
        %1509 = vmatpush1.bf16.msra.mxu0 0
        %1510 = vmatprep.subr.bf16.mxu0 0
        %1511 = vmatpush1.bf16.msra.mxu0 0
        %1512 = vmatprep.subr.bf16.mxu0 0
        %1513 = vmatpush1.bf16.msra.mxu0 0
        %1514 = vmatprep.subr.bf16.mxu0 0
        %1515 = vmatpush1.bf16.msra.mxu0 0
        %1516 = vmatprep.subr.bf16.mxu0 0
        %1517 = vmatpush1.bf16.msra.mxu0 0
        %1518 = vmatprep.subr.bf16.mxu0 0
        %1519 = vmatpush1.bf16.msra.mxu0 0
        %1520 = vmatprep.subr.bf16.mxu0 0
        %1521 = vmatpush1.bf16.msra.mxu0 0
        %1522 = vmatprep.subr.bf16.mxu0 0
        %1523 = vmatpush1.bf16.msra.mxu0 0
        %1524 = vmatprep.subr.bf16.mxu0 0
        %1525 = vmatpush1.bf16.msra.mxu0 0
        %1526 = vmatprep.subr.bf16.mxu0 0
        %1527 = vmatpush1.bf16.msra.mxu0 0
        %1528 = vmatprep.subr.bf16.mxu0 0
        %1529 = vmatpush1.bf16.msra.mxu0 0
        %1530 = vmatprep.mubr.bf16.mxu0 0
        %1531 = vmatmul.mubr.bf16.gmra.mrb[0].mxu0 %v1496
        %v1532 = vpop.f32.mrb[0].mxu0
        %v1533 = vadd.f32 %v1480, %v1532
        %v1534 = vpop.f32.mrb[0].mxu0
        %v1535 = vpop.f32.mrb[0].mxu0
        %v1536 = vpop.f32.mrb[0].mxu0
        %1537 = vdwg.mxu0
        %v1538 = vadd.f32 %v891, %v1533
        %v1539 = vld [vmem:[%s838] sm:$0x1]
        %v1540 = vld [vmem:[%s841] sm:$0x1]
        %1541 = vadd.xlane.f32.xlu0 %v1538
        %v1542 = vpop.xlane.xlu0 %1541
        %v1543 = vmul.f32 %v1542, 0.03125
        %v1544 = vmul.f32 %v1538, %v1538
        %1545 = vadd.xlane.f32.xlu0 %v1544
        %v1546 = vpop.xlane.xlu0 %1545
        %v1547 = vmul.f32 %v1546, 0.03125
        %v1548 = vmul.f32 %v1543, %v1543
        %v1549 = vsub.f32 %v1547, %v1548
        %v1550 = vmax.f32 %v1549, 0.0
        %v1551 = vsub.f32 %v1538, %v1543
        %v1552 = vadd.f32 %v1550, 1e-12
        %v1553 = vrsqrt.pop %v1552
        %v1554 = vmul.f32 %v1551, %v1553
        %v1556 = vlaneseq
        %v1557 = vshrl.u32 %v1556, 7
        %v1558 = vsub.s32 0, %v1557
        %v1559 = vrot.slane %v1539, %v1558
        %v1561 = vmul.f32 %v1554, %v1559
        %v1563 = vlaneseq
        %v1564 = vshrl.u32 %v1563, 7
        %v1565 = vsub.s32 0, %v1564
        %v1566 = vrot.slane %v1540, %v1565
        %v1568 = vadd.f32 %v1561, %v1566
        %v1569 = vpack.c.bf16 %v1568, %v1568
        %v1570 = vld [vmem:[%s722] sm:$0xf]
        %v1571 = vld [vmem:[%s722 + $0x4] sm:$0xf]
        %v1572 = vld [vmem:[%s722 + $0x8] sm:$0xf]
        %v1573 = vld [vmem:[%s722 + $0xc] sm:$0xf]
        %v1574 = vld [vmem:[%s722 + $0x10] sm:$0xf]
        %v1575 = vld [vmem:[%s722 + $0x14] sm:$0xf]
        %v1576 = vld [vmem:[%s722 + $0x18] sm:$0xf]
        %v1577 = vld [vmem:[%s722 + $0x1c] sm:$0xf]
        %v1578 = vld [vmem:[%s722 + $0x20] sm:$0xf]
        %v1579 = vld [vmem:[%s722 + $0x24] sm:$0xf]
        %v1580 = vld [vmem:[%s722 + $0x28] sm:$0xf]
        %v1581 = vld [vmem:[%s722 + $0x2c] sm:$0xf]
        %v1582 = vld [vmem:[%s722 + $0x30] sm:$0xf]
        %v1583 = vld [vmem:[%s722 + $0x34] sm:$0xf]
        %v1584 = vld [vmem:[%s722 + $0x38] sm:$0xf]
        %v1585 = vld [vmem:[%s722 + $0x3c] sm:$0xf]
        %v1586 = vld [vmem:[%s844] sm:$0x1]
        %v1588 = vlaneseq
        %v1589 = vshrl.u32 %v1588, 7
        %v1590 = vsub.s32 0, %v1589
        %v1591 = vrot.slane %v1586, %v1590
        %v1609 = vunpack.c.l.b16 %v1570
        %v1610 = vunpack.c.l.b16 %v1571
        %v1611 = vunpack.c.l.b16 %v1572
        %v1612 = vunpack.c.l.b16 %v1573
        %v1613 = vunpack.c.l.b16 %v1574
        %v1614 = vunpack.c.l.b16 %v1575
        %v1615 = vunpack.c.l.b16 %v1576
        %v1616 = vunpack.c.l.b16 %v1577
        %v1617 = vunpack.c.l.b16 %v1578
        %v1618 = vunpack.c.l.b16 %v1579
        %v1619 = vunpack.c.l.b16 %v1580
        %v1620 = vunpack.c.l.b16 %v1581
        %v1621 = vunpack.c.l.b16 %v1582
        %v1622 = vunpack.c.l.b16 %v1583
        %v1623 = vunpack.c.l.b16 %v1584
        %v1624 = vunpack.c.l.b16 %v1585
        %v1625 = vpack.c.b16 %v1610, %v1609
        %v1626 = vpack.c.b16 %v1612, %v1611
        %v1627 = vpack.c.b16 %v1614, %v1613
        %v1628 = vpack.c.b16 %v1616, %v1615
        %v1629 = vpack.c.b16 %v1618, %v1617
        %v1630 = vpack.c.b16 %v1620, %v1619
        %v1631 = vpack.c.b16 %v1622, %v1621
        %v1632 = vpack.c.b16 %v1624, %v1623
        %1641 = vmatprep.subr.bf16.mxu0 0
        %1642 = vmatpush1.bf16.msra.mxu0 %v1625
        %1643 = vmatprep.subr.bf16.mxu0 0
        %1644 = vmatpush1.bf16.msra.mxu0 %v1626
        %1645 = vmatprep.subr.bf16.mxu0 0
        %1646 = vmatpush1.bf16.msra.mxu0 %v1627
        %1647 = vmatprep.subr.bf16.mxu0 0
        %1648 = vmatpush1.bf16.msra.mxu0 %v1628
        %1649 = vmatprep.subr.bf16.mxu0 0
        %1650 = vmatpush1.bf16.msra.mxu0 %v1629
        %1651 = vmatprep.subr.bf16.mxu0 0
        %1652 = vmatpush1.bf16.msra.mxu0 %v1630
        %1653 = vmatprep.subr.bf16.mxu0 0
        %1654 = vmatpush1.bf16.msra.mxu0 %v1631
        %1655 = vmatprep.subr.bf16.mxu0 0
        %1656 = vmatpush1.bf16.msra.mxu0 %v1632
        %1657 = vmatprep.subr.bf16.mxu0 0
        %1658 = vmatpush1.bf16.msra.mxu0 0
        %1659 = vmatprep.subr.bf16.mxu0 0
        %1660 = vmatpush1.bf16.msra.mxu0 0
        %1661 = vmatprep.subr.bf16.mxu0 0
        %1662 = vmatpush1.bf16.msra.mxu0 0
        %1663 = vmatprep.subr.bf16.mxu0 0
        %1664 = vmatpush1.bf16.msra.mxu0 0
        %1665 = vmatprep.subr.bf16.mxu0 0
        %1666 = vmatpush1.bf16.msra.mxu0 0
        %1667 = vmatprep.subr.bf16.mxu0 0
        %1668 = vmatpush1.bf16.msra.mxu0 0
        %1669 = vmatprep.subr.bf16.mxu0 0
        %1670 = vmatpush1.bf16.msra.mxu0 0
        %1671 = vmatprep.subr.bf16.mxu0 0
        %1672 = vmatpush1.bf16.msra.mxu0 0
        %1673 = vmatprep.mubr.bf16.mxu0 0
        %1674 = vmatmul.mubr.bf16.gmra.mrb[0].mxu0 %v1569
        %v1675 = vpop.f32.mrb[0].mxu0
        %v1676 = vadd.f32 %v1591, %v1675
        %v1677 = vpop.f32.mrb[0].mxu0
        %v1678 = vpop.f32.mrb[0].mxu0
        %v1679 = vpop.f32.mrb[0].mxu0
        %1680 = vdwg.mxu0
        %v1681 = vmul.f32 %v1676, 0.5
        %v1682 = vmul.f32 %v1676, 0.044715
        %v1683 = vmul.f32 %v1682, %v1676
        %v1684 = vmul.f32 %v1683, %v1676
        %v1685 = vadd.f32 %v1676, %v1684
        %v1686 = vmul.f32 %v1685, 0.7978846
        %v1687 = vtanh.pop %v1686
        %v1688 = vadd.f32 %v1687, 1.0
        %v1689 = vmul.f32 %v1681, %v1688
        %v1690 = vpack.c.bf16 %v1689, %v1689
        %v1691 = vld [vmem:[%s731] sm:$0xf]
        %v1692 = vld [vmem:[%s731 + $0x4] sm:$0xf]
        %v1693 = vld [vmem:[%s731 + $0x8] sm:$0xf]
        %v1694 = vld [vmem:[%s731 + $0xc] sm:$0xf]
        %v1695 = vld [vmem:[%s731 + $0x10] sm:$0xf]
        %v1696 = vld [vmem:[%s731 + $0x14] sm:$0xf]
        %v1697 = vld [vmem:[%s731 + $0x18] sm:$0xf]
        %v1698 = vld [vmem:[%s731 + $0x1c] sm:$0xf]
        %v1699 = vld [vmem:[%s731 + $0x20] sm:$0xf]
        %v1700 = vld [vmem:[%s731 + $0x24] sm:$0xf]
        %v1701 = vld [vmem:[%s731 + $0x28] sm:$0xf]
        %v1702 = vld [vmem:[%s731 + $0x2c] sm:$0xf]
        %v1703 = vld [vmem:[%s731 + $0x30] sm:$0xf]
        %v1704 = vld [vmem:[%s731 + $0x34] sm:$0xf]
        %v1705 = vld [vmem:[%s731 + $0x38] sm:$0xf]
        %v1706 = vld [vmem:[%s731 + $0x3c] sm:$0xf]
        %v1707 = vld [vmem:[%s847] sm:$0x1]
        %v1709 = vlaneseq
        %v1710 = vshrl.u32 %v1709, 7
        %v1711 = vsub.s32 0, %v1710
        %v1712 = vrot.slane %v1707, %v1711
        %v1730 = vunpack.c.l.b16 %v1691
        %v1731 = vunpack.c.l.b16 %v1692
        %v1732 = vunpack.c.l.b16 %v1693
        %v1733 = vunpack.c.l.b16 %v1694
        %v1734 = vunpack.c.l.b16 %v1695
        %v1735 = vunpack.c.l.b16 %v1696
        %v1736 = vunpack.c.l.b16 %v1697
        %v1737 = vunpack.c.l.b16 %v1698
        %v1738 = vunpack.c.l.b16 %v1699
        %v1739 = vunpack.c.l.b16 %v1700
        %v1740 = vunpack.c.l.b16 %v1701
        %v1741 = vunpack.c.l.b16 %v1702
        %v1742 = vunpack.c.l.b16 %v1703
        %v1743 = vunpack.c.l.b16 %v1704
        %v1744 = vunpack.c.l.b16 %v1705
        %v1745 = vunpack.c.l.b16 %v1706
        %v1746 = vpack.c.b16 %v1731, %v1730
        %v1747 = vpack.c.b16 %v1733, %v1732
        %v1748 = vpack.c.b16 %v1735, %v1734
        %v1749 = vpack.c.b16 %v1737, %v1736
        %v1750 = vpack.c.b16 %v1739, %v1738
        %v1751 = vpack.c.b16 %v1741, %v1740
        %v1752 = vpack.c.b16 %v1743, %v1742
        %v1753 = vpack.c.b16 %v1745, %v1744
        %1762 = vmatprep.subr.bf16.mxu0 0
        %1763 = vmatpush1.bf16.msra.mxu0 %v1746
        %1764 = vmatprep.subr.bf16.mxu0 0
        %1765 = vmatpush1.bf16.msra.mxu0 %v1747
        %1766 = vmatprep.subr.bf16.mxu0 0
        %1767 = vmatpush1.bf16.msra.mxu0 %v1748
        %1768 = vmatprep.subr.bf16.mxu0 0
        %1769 = vmatpush1.bf16.msra.mxu0 %v1749
        %1770 = vmatprep.subr.bf16.mxu0 0
        %1771 = vmatpush1.bf16.msra.mxu0 %v1750
        %1772 = vmatprep.subr.bf16.mxu0 0
        %1773 = vmatpush1.bf16.msra.mxu0 %v1751
        %1774 = vmatprep.subr.bf16.mxu0 0
        %1775 = vmatpush1.bf16.msra.mxu0 %v1752
        %1776 = vmatprep.subr.bf16.mxu0 0
        %1777 = vmatpush1.bf16.msra.mxu0 %v1753
        %1778 = vmatprep.subr.bf16.mxu0 0
        %1779 = vmatpush1.bf16.msra.mxu0 0
        %1780 = vmatprep.subr.bf16.mxu0 0
        %1781 = vmatpush1.bf16.msra.mxu0 0
        %1782 = vmatprep.subr.bf16.mxu0 0
        %1783 = vmatpush1.bf16.msra.mxu0 0
        %1784 = vmatprep.subr.bf16.mxu0 0
        %1785 = vmatpush1.bf16.msra.mxu0 0
        %1786 = vmatprep.subr.bf16.mxu0 0
        %1787 = vmatpush1.bf16.msra.mxu0 0
        %1788 = vmatprep.subr.bf16.mxu0 0
        %1789 = vmatpush1.bf16.msra.mxu0 0
        %1790 = vmatprep.subr.bf16.mxu0 0
        %1791 = vmatpush1.bf16.msra.mxu0 0
        %1792 = vmatprep.subr.bf16.mxu0 0
        %1793 = vmatpush1.bf16.msra.mxu0 0
        %1794 = vmatprep.mubr.bf16.mxu0 0
        %1795 = vmatmul.mubr.bf16.gmra.mrb[0].mxu0 %v1690
        %v1796 = vpop.f32.mrb[0].mxu0
        %v1797 = vadd.f32 %v1712, %v1796
        %v1798 = vpop.f32.mrb[0].mxu0
        %v1799 = vpop.f32.mrb[0].mxu0
        %v1800 = vpop.f32.mrb[0].mxu0
        %1801 = vdwg.mxu0
        %v1802 = vadd.f32 %v1568, %v1797
        %v1803 = vld [vmem:[%s850] sm:$0x1]
        %v1804 = vld [vmem:[%s853] sm:$0x1]
        %1805 = vadd.xlane.f32.xlu0 %v1802
        %v1806 = vpop.xlane.xlu0 %1805
        %v1807 = vmul.f32 %v1806, 0.03125
        %v1808 = vmul.f32 %v1802, %v1802
        %1809 = vadd.xlane.f32.xlu0 %v1808
        %v1810 = vpop.xlane.xlu0 %1809
        %v1811 = vmul.f32 %v1810, 0.03125
        %v1812 = vmul.f32 %v1807, %v1807
        %v1813 = vsub.f32 %v1811, %v1812
        %v1814 = vmax.f32 %v1813, 0.0
        %v1815 = vsub.f32 %v1802, %v1807
        %v1816 = vadd.f32 %v1814, 1e-12
        %v1817 = vrsqrt.pop %v1816
        %v1818 = vmul.f32 %v1815, %v1817
        %v1820 = vlaneseq
        %v1821 = vshrl.u32 %v1820, 7
        %v1822 = vsub.s32 0, %v1821
        %v1823 = vrot.slane %v1803, %v1822
        %v1825 = vmul.f32 %v1818, %v1823
        %v1827 = vlaneseq
        %v1828 = vshrl.u32 %v1827, 7
        %v1829 = vsub.s32 0, %v1828
        %v1830 = vrot.slane %v1804, %v1829
        %v1832 = vadd.f32 %v1825, %v1830
        %1833 = vst [vmem:[%s826] sm:$0xff] %v1832
        %s1834 = sand.u32 %s466, 1
        %s1835 = scalar_lea.sflag [#allocation4], %s1834
        %s1836 = sand.u32 %s466, 1
        %s1837 = smul.addr %s1836, 8
        %s1838 = scalar_lea.vmem [#allocation14], %s1837
        // Predicated region
        $region117: #{tpu_custom_call.1} parent=83 // pred_check
          %p1839 = pneg %p476
        $region118: #{tpu_custom_call.1} parent=83 // pred_check_branch
          %1841 = sbr.rel (%p1839) target = $region120
        $region119: #{tpu_custom_call.1} parent=83 // pred_region
          %s1843 = ssub.s32 128, 128
          %1844 = vsyncadd %s1835, %s1843
          %s1845 = smul.addr %s44, 128
          %s1846 = scalar_lea.hbm %s16, %s1845
          %s1848 = sshll.u32 %s1838, 4
          %s1849 = int_to_ptr.vmem [resolvable:$true] %s1848
          %1851 = dma.vmem_to_hbm [thread:$0]  %s1849, 128, %s1846, %s1835
        $region120: #{tpu_custom_call.1} parent=83 // pred_fallthru
          _
      $region84: #{tpu_custom_call.1} parent=5 // pred_fallthru
        _
      %p1852 = scmp.le.s32.totalorder 2, %s35
      // Predicated region
      $region121: #{tpu_custom_call.1} parent=5 // pred_check
        %p1853 = pneg %p1852
      $region122: #{tpu_custom_call.1} parent=5 // pred_check_branch
        %1855 = sbr.rel (%p1853) target = $region124
      $region123: #{tpu_custom_call.1} parent=5 // pred_region
        %s1856 = ssub.s32 %s35, 2
        // Predicated region
        $region125: #{tpu_custom_call.1} parent=123 // pred_check
          %p1857 = pneg %p482
        $region126: #{tpu_custom_call.1} parent=123 // pred_check_branch
          %1859 = sbr.rel (%p1857) target = $region128
        $region127: #{tpu_custom_call.1} parent=123 // pred_region
          %s1860 = sand.u32 %s467, 1
          %s1861 = scalar_lea.sflag [#allocation4], %s1860
          %s1862 = sand.u32 %s467, 1
          %s1863 = smul.addr %s1862, 8
          %s1864 = scalar_lea.vmem [#allocation14], %s1863
          %1865 = dma.done %s1861, 128
        $region128: #{tpu_custom_call.1} parent=123 // pred_fallthru
          _
      $region124: #{tpu_custom_call.1} parent=5 // pred_fallthru
        _
    $region6: #{tpu_custom_call.1} parent=1 // loop_footer
      %s39 = sadd.s32 1, %s35
    $region7: #{tpu_custom_call.1} parent=1 // loop_footer_branch
      %34 = sbr.rel target = $region3
    $region8: #{tpu_custom_call.1} parent=1 // loop_exit
      _
    %1866 = vsyncpa [#allocation3], 1
    %s1867 = scalar_lea.sflag [#allocation3], 1
    %1868 = vsyncpa %s1867, 1
    %1869 = vsyncpa [#allocation6], 1
    %1870 = vsyncpa [#allocation9], 1
    %s1871 = scalar_lea.sflag [#allocation9], 1
    %1872 = vsyncpa %s1871, 1
    %1873 = vsyncpa [#allocation12], 1
    %s1874 = scalar_lea.sflag [#allocation12], 1
    %1875 = vsyncpa %s1874, 1
    %1876 = vsyncpa [#allocation4], 1
    %s1877 = scalar_lea.sflag [#allocation4], 1
    %1878 = vsyncpa %s1877, 1

</llo_original>
